<compile_context>
chip_gen: v7x
topology: tpu7x:2x2x1
jax: 0.10.0
libtpu: 0.0.40
codegen_flags: <defaults>
</compile_context>

<pallas_src>
import functools

import jax
import jax.numpy as jnp
from jax.experimental import pallas as pl
from jax.experimental.pallas import tpu as pltpu

LANE = 128


def _round_up(x, m):
    return (x + m - 1) // m * m


# ---------------------------------------------------------------------------
# Fused Pallas kernel: conv_a -> conv_b -> (+ residual), B images per grid step
# ---------------------------------------------------------------------------
def _reduction_kernel(bsz, ho, wo,
                      xs_ref, wa_ref, sha_ref, wb_ref, wr_ref, shb_ref,
                      o_ref, ap_ref):
    cpad = o_ref.shape[-1]
    cin4p = xs_ref.shape[-1]
    m = bsz * ho * wo

    xs = xs_ref[...]                                   # [B, ho+1, wo+1, cin4p] f32
    xr = jnp.maximum(xs, 0.0).astype(jnp.bfloat16)     # ReLU feeding conv_a

    # ---- conv_a: 3x3 stride-2 conv == one wide-K matmul over the 4 space-to-depth
    #      block taps concatenated along channels (phase selection baked into wa).
    xa = jnp.concatenate(
        [xr[:, by:by + ho, bx:bx + wo, :] for by in range(2) for bx in range(2)],
        axis=-1).reshape(m, 4 * cin4p)
    a = jnp.dot(xa, wa_ref[...], preferred_element_type=jnp.float32) + sha_ref[...]

    # ---- stash relu(a) in the interior of a halo'd VMEM scratch.  Only the
    #      1-pixel border is (re)zeroed each step: no full-scratch store, no
    #      interior double-write, and no cross-step scratch state (safe under
    #      "parallel" grid semantics / multi-TensorCore splits).
    zrow = jnp.zeros((bsz, 1, wo + 2, cpad), jnp.bfloat16)
    zcol = jnp.zeros((bsz, ho, 1, cpad), jnp.bfloat16)
    ap_ref[:, 0:1, :, :] = zrow
    ap_ref[:, ho + 1:ho + 2, :, :] = zrow
    ap_ref[:, 1:ho + 1, 0:1, :] = zcol
    ap_ref[:, 1:ho + 1, wo + 1:wo + 2, :] = zcol
    ap_ref[:, 1:ho + 1, 1:wo + 1, :] = (
        jnp.maximum(a, 0.0).astype(jnp.bfloat16).reshape(bsz, ho, wo, cpad))
    ap = ap_ref[...]                                   # [B, ho+2, wo+2, cpad] bf16

    # ---- conv_b: 3x3 stride-1 conv == one im2col matmul, K = 9*cpad
    xb = jnp.concatenate(
        [ap[:, dy:dy + ho, dx:dx + wo, :] for dy in range(3) for dx in range(3)],
        axis=-1).reshape(m, 9 * cpad)
    acc_b = jnp.dot(xb, wb_ref[...], preferred_element_type=jnp.float32)

    # ---- residual: AvgPool2x2 + Conv1x1 == one f32 matmul vs 0.25*stacked w_r,
    #      with conv_b's BN shift folded in (saves a separate full-tile add).
    xc = xs[:, 1:ho + 1, 1:wo + 1, :].reshape(m, cin4p)
    res = jnp.dot(xc, wr_ref[...], preferred_element_type=jnp.float32) + shb_ref[...]

    o_ref[...] = (acc_b + res).reshape(bsz, ho, wo, cpad).astype(o_ref.dtype)


# ---------------------------------------------------------------------------
# Wrapper-side packing (layout plumbing + BN folding; one-time weight prep)
# ---------------------------------------------------------------------------
def _space_to_depth_pad(x_nhwc, cin4p):
    """[N,H,W,C] -> [N, H/2+1, W/2+1, cin4p]; channel = (py*2+px)*C + c,
    one zero block-row/col halo at the top-left, channels zero-padded to cin4p."""
    n, h, w, c = x_nhwc.shape
    ho, wo = h // 2, w // 2
    xs = x_nhwc.reshape(n, ho, 2, wo, 2, c).transpose(0, 1, 3, 2, 4, 5)
    xs = xs.reshape(n, ho, wo, 4 * c)
    return jnp.pad(xs, ((0, 0), (1, 0), (1, 0), (0, cin4p - 4 * c)))


def _pack_params(params, cin, cout, cpad, cin4p):
    w_a, scale_a, shift_a, w_b, scale_b, shift_b, w_r = params
    w_a_s = w_a * scale_a.reshape(1, 1, 1, cout)       # fold BN scale (inference)
    w_b_s = w_b * scale_b.reshape(1, 1, 1, cout)

    # conv_a: repack 3x3/stride-2 HWIO weights into a single [4*cin4p, cpad] matrix
    # matching the kernel's operand row layout: row = (by*2+bx)*cin4p + (py*2+px)*cin + ci.
    # Block tap by + phase py map to kernel tap dy via {(0,1):0,(1,0):1,(1,1):2};
    # (0,0) is outside the 3x3 support (weight 0).  Same for the x axis.
    dmap = {(0, 1): 0, (1, 0): 1, (1, 1): 2}
    wa = jnp.zeros((4, cin4p, cpad), jnp.float32)
    for by in range(2):
        for bx in range(2):
            blk = by * 2 + bx
            for py in range(2):
                for px in range(2):
                    if (by, py) in dmap and (bx, px) in dmap:
                        dy, dx = dmap[(by, py)], dmap[(bx, px)]
                        r0 = (py * 2 + px) * cin
                        wa = wa.at[blk, r0:r0 + cin, :cout].set(w_a_s[dy, dx])
    wa = wa.reshape(4 * cin4p, cpad).astype(jnp.bfloat16)

    # conv_b: im2col weight layout, row = (dy*3+dx)*cpad + ci
    wb = jnp.zeros((9, cpad, cpad), jnp.float32)
    wb = wb.at[:, :cout, :cout].set(w_b_s.reshape(9, cout, cout))
    wb = wb.reshape(9 * cpad, cpad).astype(jnp.bfloat16)

    # residual: avgpool(2,2) then 1x1 conv == (sum of 4 phases) @ (0.25 * w_r);
    # kept in f32 (accuracy of the residual path).
    wr = jnp.zeros((cin4p, cpad), jnp.float32)
    wr = wr.at[:4 * cin, :cout].set(jnp.tile(0.25 * w_r, (4, 1)))

    sha = jnp.zeros((1, cpad), jnp.float32).at[0, :cout].set(shift_a.reshape(-1))
    shb = jnp.zeros((1, cpad), jnp.float32).at[0, :cout].set(shift_b.reshape(-1))
    return wa, sha, wb, wr, shb


def _whole_spec(arr):
    zeros = (0,) * arr.ndim
    return pl.BlockSpec(arr.shape, lambda b, _z=zeros: _z)


def _pick_batch_group(n, ho, wo, target_m):
    """Images per grid step: smallest divisor of n with B*ho*wo >= target_m."""
    want = max(1, -(-target_m // (ho * wo)))           # ceil(target_m / (ho*wo))
    divisors = [d for d in range(1, n + 1) if n % d == 0]
    geq = [d for d in divisors if d >= want]
    return min(geq) if geq else n


# ---------------------------------------------------------------------------
# Forward pass of the `reduction` module (PyTorch NCHW layout at the boundary)
# ---------------------------------------------------------------------------
def reduction_forward(x_nchw, params, *, target_m=256):
    """x_nchw: [N, Cin, H, W] f32  ->  [N, Cout, H/2, W/2] f32."""
    n, cin, h, w = x_nchw.shape
    assert h % 2 == 0 and w % 2 == 0, "reduction expects even spatial dims"
    cout = params[0].shape[-1]
    cpad = _round_up(cout, LANE)
    cin4p = _round_up(4 * cin, LANE)                   # lane-dense input channels
    ho, wo = h // 2, w // 2

    # Batch images per step so M = B*ho*wo reaches the MXU row count
    # (256 on v6e/v7x, 128 on v5e); B must divide n.
    bsz = _pick_batch_group(n, ho, wo, target_m)

    x = jnp.transpose(x_nchw, (0, 2, 3, 1))            # NHWC
    xs = _space_to_depth_pad(x, cin4p)                 # [n, ho+1, wo+1, cin4p]
    wa, sha, wb, wr, shb = _pack_params(params, cin, cout, cpad, cin4p)

    kernel = functools.partial(_reduction_kernel, bsz, ho, wo)

    out_pad = pl.pallas_call(
        kernel,
        out_shape=jax.ShapeDtypeStruct((n, ho, wo, cpad), jnp.float32),
        grid_spec=pltpu.PrefetchScalarGridSpec(
            num_scalar_prefetch=0,
            grid=(n // bsz,),
            in_specs=[
                pl.BlockSpec((bsz, ho + 1, wo + 1, cin4p),
                             lambda b: (b, 0, 0, 0)),
                _whole_spec(wa),   # weights stay VMEM-resident across steps
                _whole_spec(sha),
                _whole_spec(wb),
                _whole_spec(wr),
                _whole_spec(shb),
            ],
            out_specs=pl.BlockSpec((bsz, ho, wo, cpad), lambda b: (b, 0, 0, 0)),
            scratch_shapes=[
                pltpu.VMEM((bsz, ho + 2, wo + 2, cpad), jnp.bfloat16)],
        ),
        compiler_params=pltpu.CompilerParams(
            dimension_semantics=("parallel",),
            # v7x has only 64 MiB physical VMEM (32 MiB scoped default); the
            # per-step footprint here is far below this — keep headroom when
            # raising bsz / spatial tiles.
            vmem_limit_bytes=32 * 1024 * 1024,
        ),
    )(xs, wa, sha, wb, wr, shb)

    out = out_pad[..., :cout]                          # drop lane padding
    return jnp.transpose(out, (0, 3, 1, 2))            # back to NCHW


# ---------------------------------------------------------------------------
# Deterministic parameters (mirrors the nn.Module shapes; BN in eval semantics)
# ---------------------------------------------------------------------------
def make_params(key, cin, cout, eps=1e-5):
    ks = jax.random.split(key, 11)
    w_a = jax.random.normal(ks[0], (3, 3, cin, cout), jnp.float32) * 0.1   # HWIO
    w_b = jax.random.normal(ks[1], (3, 3, cout, cout), jnp.float32) * 0.1
    w_r = jax.random.normal(ks[2], (cin, cout), jnp.float32) * 0.1

    def bn(kg, kb, km, kv):
        gamma = 1.0 + 0.1 * jax.random.normal(kg, (cout,), jnp.float32)
        beta = 0.1 * jax.random.normal(kb, (cout,), jnp.float32)
        mean = 0.1 * jax.random.normal(km, (cout,), jnp.float32)
        var = jnp.abs(jax.random.normal(kv, (cout,), jnp.float32)) + 0.5
        scale = gamma / jnp.sqrt(var + eps)
        shift = beta - mean * scale
        return scale.reshape(1, cout), shift.reshape(1, cout)

    scale_a, shift_a = bn(ks[3], ks[4], ks[5], ks[6])
    scale_b, shift_b = bn(ks[7], ks[8], ks[9], ks[10])
    return (w_a, scale_a, shift_a, w_b, scale_b, shift_b, w_r)


# ---------------------------------------------------------------------------
# Pure-JAX reference (sanity check of the Pallas path)
# ---------------------------------------------------------------------------
def reference_forward(x_nchw, params):
    w_a, scale_a, shift_a, w_b, scale_b, shift_b, w_r = params
    x = jnp.transpose(x_nchw, (0, 2, 3, 1))
    dn = ("NHWC", "HWIO", "NHWC")
    a = jax.lax.conv_general_dilated(jnp.maximum(x, 0.0), w_a, (2, 2),
                                     ((1, 1), (1, 1)), dimension_numbers=dn)
    a = a * scale_a.reshape(1, 1, 1, -1) + shift_a.reshape(1, 1, 1, -1)
    b = jax.lax.conv_general_dilated(jnp.maximum(a, 0.0), w_b, (1, 1),
                                     ((1, 1), (1, 1)), dimension_numbers=dn)
    b = b * scale_b.reshape(1, 1, 1, -1) + shift_b.reshape(1, 1, 1, -1)
    pooled = jax.lax.reduce_window(x, 0.0, jax.lax.add,
                                   (1, 2, 2, 1), (1, 2, 2, 1), "VALID") / 4.0
    r = jnp.einsum("nhwc,co->nhwo", pooled, w_r)
    return jnp.transpose(r + b, (0, 3, 1, 2))


if __name__ == "__main__":
    N, Cin, Cout, H, W = 2, 4, 8, 16, 16
    key = jax.random.PRNGKey(0)
    kx, kp = jax.random.split(key)
    x = jax.random.normal(kx, (N, Cin, H, W), jnp.float32)   # NCHW, as in PyTorch
    params = make_params(kp, Cin, Cout)

    fwd = jax.jit(reduction_forward)
    out = jax.block_until_ready(fwd(x, params))

    ref = reference_forward(x, params)
    assert out.shape == (N, Cout, H // 2, W // 2)
    assert jnp.allclose(out, ref, atol=1e-2, rtol=1e-2), "mismatch vs JAX reference"
    print("KERNEL_OK")
</pallas_src>

<mosaic_0001>
module attributes {stable_mosaic.version = 11 : i64} {
  func.func @_reduction_kernel(%arg0: i32, %arg1: memref<2x9x9x128xf32, #tpu.memory_space<vmem>>, %arg2: memref<512x128xbf16, #tpu.memory_space<vmem>>, %arg3: memref<1x128xf32, #tpu.memory_space<vmem>>, %arg4: memref<1152x128xbf16, #tpu.memory_space<vmem>>, %arg5: memref<128x128xf32, #tpu.memory_space<vmem>>, %arg6: memref<1x128xf32, #tpu.memory_space<vmem>>, %arg7: memref<2x8x8x128xf32, #tpu.memory_space<vmem>>, %arg8: memref<2x10x10x128xbf16, #tpu.memory_space<vmem>>) attributes {dimension_semantics = [#tpu.dimension_semantics<parallel>], iteration_bounds = array<i64: 1>, scalar_prefetch = 0 : i64, scratch_operands = 1 : i64, tpu.core_type = #tpu.core_type<tc>, window_params = [{transform_indices = @transform_0, window_bounds = array<i64: 2, 9, 9, 128>}, {pipeline_mode = #tpu.pipeline_mode<synchronous>, transform_indices = @transform_1, window_bounds = array<i64: 512, 128>}, {pipeline_mode = #tpu.pipeline_mode<synchronous>, transform_indices = @transform_2, window_bounds = array<i64: 1, 128>}, {pipeline_mode = #tpu.pipeline_mode<synchronous>, transform_indices = @transform_3, window_bounds = array<i64: 1152, 128>}, {pipeline_mode = #tpu.pipeline_mode<synchronous>, transform_indices = @transform_4, window_bounds = array<i64: 128, 128>}, {pipeline_mode = #tpu.pipeline_mode<synchronous>, transform_indices = @transform_5, window_bounds = array<i64: 1, 128>}, {transform_indices = @transform_6, window_bounds = array<i64: 2, 8, 8, 128>}]} {
    %c0 = arith.constant 0 : index
    %c0_0 = arith.constant 0 : index
    %c0_1 = arith.constant 0 : index
    %c0_2 = arith.constant 0 : index
    %0 = vector.load %arg1[%c0, %c0_0, %c0_1, %c0_2] : memref<2x9x9x128xf32, #tpu.memory_space<vmem>>, vector<2x9x9x128xf32>
    %cst = arith.constant 0.000000e+00 : f32
    %1 = vector.broadcast %cst : f32 to vector<2x9x9x128xf32>
    %2 = arith.maximumf %0, %1 : vector<2x9x9x128xf32>
    %3 = arith.truncf %2 : vector<2x9x9x128xf32> to vector<2x9x9x128xbf16>
    %4 = vector.extract_strided_slice %3 {offsets = [0, 0, 0, 0], sizes = [2, 8, 8, 128], strides = [1, 1, 1, 1]} : vector<2x9x9x128xbf16> to vector<2x8x8x128xbf16>
    %5 = vector.extract_strided_slice %3 {offsets = [0, 0, 1, 0], sizes = [2, 8, 8, 128], strides = [1, 1, 1, 1]} : vector<2x9x9x128xbf16> to vector<2x8x8x128xbf16>
    %6 = vector.extract_strided_slice %3 {offsets = [0, 1, 0, 0], sizes = [2, 8, 8, 128], strides = [1, 1, 1, 1]} : vector<2x9x9x128xbf16> to vector<2x8x8x128xbf16>
    %7 = vector.extract_strided_slice %3 {offsets = [0, 1, 1, 0], sizes = [2, 8, 8, 128], strides = [1, 1, 1, 1]} : vector<2x9x9x128xbf16> to vector<2x8x8x128xbf16>
    %8 = tpu.concatenate %4, %5, %6, %7 in 3 : vector<2x8x8x128xbf16>, vector<2x8x8x128xbf16>, vector<2x8x8x128xbf16>, vector<2x8x8x128xbf16> -> vector<2x8x8x512xbf16>
    %9 = vector.shape_cast %8 : vector<2x8x8x512xbf16> to vector<128x512xbf16>
    %c0_3 = arith.constant 0 : index
    %c0_4 = arith.constant 0 : index
    %10 = vector.load %arg2[%c0_3, %c0_4] : memref<512x128xbf16, #tpu.memory_space<vmem>>, vector<512x128xbf16>
    %cst_5 = arith.constant dense<0.000000e+00> : vector<128x128xf32>
    %11 = tpu.matmul %9, %10, %cst_5 {dimension_numbers = #tpu.dot_dimension_numbers<[1], [0], [0], [1], [0, 0, 1, 1], [], []>} : vector<128x512xbf16>, vector<512x128xbf16>, vector<128x128xf32> -> vector<128x128xf32>
    %c0_6 = arith.constant 0 : index
    %c0_7 = arith.constant 0 : index
    %12 = vector.load %arg3[%c0_6, %c0_7] : memref<1x128xf32, #tpu.memory_space<vmem>>, vector<1x128xf32>
    %13 = vector.broadcast %12 : vector<1x128xf32> to vector<128x128xf32>
    %14 = arith.addf %11, %13 : vector<128x128xf32>
    %cst_8 = arith.constant 0.000000e+00 : bf16
    %15 = vector.broadcast %cst_8 : bf16 to vector<2x1x10x128xbf16>
    %cst_9 = arith.constant 0.000000e+00 : bf16
    %16 = vector.broadcast %cst_9 : bf16 to vector<2x8x1x128xbf16>
    %c0_10 = arith.constant 0 : index
    %c0_11 = arith.constant 0 : index
    %c0_12 = arith.constant 0 : index
    %c0_13 = arith.constant 0 : index
    %17 = vector.load %arg8[%c0_10, %c0_11, %c0_12, %c0_13] : memref<2x10x10x128xbf16, #tpu.memory_space<vmem>>, vector<2x1x10x128xbf16>
    tpu.vector_store %arg8[%c0_10, %c0_11, %c0_12, %c0_13], %15 {strides = array<i32>} : memref<2x10x10x128xbf16, #tpu.memory_space<vmem>>, vector<2x1x10x128xbf16>,
    %c0_14 = arith.constant 0 : index
    %c9 = arith.constant 9 : index
    %c0_15 = arith.constant 0 : index
    %c0_16 = arith.constant 0 : index
    %18 = vector.load %arg8[%c0_14, %c9, %c0_15, %c0_16] : memref<2x10x10x128xbf16, #tpu.memory_space<vmem>>, vector<2x1x10x128xbf16>
    tpu.vector_store %arg8[%c0_14, %c9, %c0_15, %c0_16], %15 {strides = array<i32>} : memref<2x10x10x128xbf16, #tpu.memory_space<vmem>>, vector<2x1x10x128xbf16>,
    %c0_17 = arith.constant 0 : index
    %c1 = arith.constant 1 : index
    %c0_18 = arith.constant 0 : index
    %c0_19 = arith.constant 0 : index
    %19 = vector.load %arg8[%c0_17, %c1, %c0_18, %c0_19] : memref<2x10x10x128xbf16, #tpu.memory_space<vmem>>, vector<2x8x1x128xbf16>
    tpu.vector_store %arg8[%c0_17, %c1, %c0_18, %c0_19], %16 {strides = array<i32>} : memref<2x10x10x128xbf16, #tpu.memory_space<vmem>>, vector<2x8x1x128xbf16>,
    %c0_20 = arith.constant 0 : index
    %c1_21 = arith.constant 1 : index
    %c9_22 = arith.constant 9 : index
    %c0_23 = arith.constant 0 : index
    %20 = vector.load %arg8[%c0_20, %c1_21, %c9_22, %c0_23] : memref<2x10x10x128xbf16, #tpu.memory_space<vmem>>, vector<2x8x1x128xbf16>
    tpu.vector_store %arg8[%c0_20, %c1_21, %c9_22, %c0_23], %16 {strides = array<i32>} : memref<2x10x10x128xbf16, #tpu.memory_space<vmem>>, vector<2x8x1x128xbf16>,
    %cst_24 = arith.constant 0.000000e+00 : f32
    %21 = vector.broadcast %cst_24 : f32 to vector<128x128xf32>
    %22 = arith.maximumf %14, %21 : vector<128x128xf32>
    %23 = arith.truncf %22 : vector<128x128xf32> to vector<128x128xbf16>
    %24 = vector.shape_cast %23 : vector<128x128xbf16> to vector<2x8x8x128xbf16>
    %c0_25 = arith.constant 0 : index
    %c1_26 = arith.constant 1 : index
    %c1_27 = arith.constant 1 : index
    %c0_28 = arith.constant 0 : index
    %25 = vector.load %arg8[%c0_25, %c1_26, %c1_27, %c0_28] : memref<2x10x10x128xbf16, #tpu.memory_space<vmem>>, vector<2x8x8x128xbf16>
    tpu.vector_store %arg8[%c0_25, %c1_26, %c1_27, %c0_28], %24 {strides = array<i32>} : memref<2x10x10x128xbf16, #tpu.memory_space<vmem>>, vector<2x8x8x128xbf16>,
    %c0_29 = arith.constant 0 : index
    %c0_30 = arith.constant 0 : index
    %c0_31 = arith.constant 0 : index
    %c0_32 = arith.constant 0 : index
    %26 = vector.load %arg8[%c0_29, %c0_30, %c0_31, %c0_32] : memref<2x10x10x128xbf16, #tpu.memory_space<vmem>>, vector<2x10x10x128xbf16>
    %27 = vector.extract_strided_slice %26 {offsets = [0, 0, 0, 0], sizes = [2, 8, 8, 128], strides = [1, 1, 1, 1]} : vector<2x10x10x128xbf16> to vector<2x8x8x128xbf16>
    %28 = vector.extract_strided_slice %26 {offsets = [0, 0, 1, 0], sizes = [2, 8, 8, 128], strides = [1, 1, 1, 1]} : vector<2x10x10x128xbf16> to vector<2x8x8x128xbf16>
    %29 = vector.extract_strided_slice %26 {offsets = [0, 0, 2, 0], sizes = [2, 8, 8, 128], strides = [1, 1, 1, 1]} : vector<2x10x10x128xbf16> to vector<2x8x8x128xbf16>
    %30 = vector.extract_strided_slice %26 {offsets = [0, 1, 0, 0], sizes = [2, 8, 8, 128], strides = [1, 1, 1, 1]} : vector<2x10x10x128xbf16> to vector<2x8x8x128xbf16>
    %31 = vector.extract_strided_slice %26 {offsets = [0, 1, 1, 0], sizes = [2, 8, 8, 128], strides = [1, 1, 1, 1]} : vector<2x10x10x128xbf16> to vector<2x8x8x128xbf16>
    %32 = vector.extract_strided_slice %26 {offsets = [0, 1, 2, 0], sizes = [2, 8, 8, 128], strides = [1, 1, 1, 1]} : vector<2x10x10x128xbf16> to vector<2x8x8x128xbf16>
    %33 = vector.extract_strided_slice %26 {offsets = [0, 2, 0, 0], sizes = [2, 8, 8, 128], strides = [1, 1, 1, 1]} : vector<2x10x10x128xbf16> to vector<2x8x8x128xbf16>
    %34 = vector.extract_strided_slice %26 {offsets = [0, 2, 1, 0], sizes = [2, 8, 8, 128], strides = [1, 1, 1, 1]} : vector<2x10x10x128xbf16> to vector<2x8x8x128xbf16>
    %35 = vector.extract_strided_slice %26 {offsets = [0, 2, 2, 0], sizes = [2, 8, 8, 128], strides = [1, 1, 1, 1]} : vector<2x10x10x128xbf16> to vector<2x8x8x128xbf16>
    %36 = tpu.concatenate %27, %28, %29, %30, %31, %32, %33, %34, %35 in 3 : vector<2x8x8x128xbf16>, vector<2x8x8x128xbf16>, vector<2x8x8x128xbf16>, vector<2x8x8x128xbf16>, vector<2x8x8x128xbf16>, vector<2x8x8x128xbf16>, vector<2x8x8x128xbf16>, vector<2x8x8x128xbf16>, vector<2x8x8x128xbf16> -> vector<2x8x8x1152xbf16>
    %37 = vector.shape_cast %36 : vector<2x8x8x1152xbf16> to vector<128x1152xbf16>
    %c0_33 = arith.constant 0 : index
    %c0_34 = arith.constant 0 : index
    %38 = vector.load %arg4[%c0_33, %c0_34] : memref<1152x128xbf16, #tpu.memory_space<vmem>>, vector<1152x128xbf16>
    %cst_35 = arith.constant dense<0.000000e+00> : vector<128x128xf32>
    %39 = tpu.matmul %37, %38, %cst_35 {dimension_numbers = #tpu.dot_dimension_numbers<[1], [0], [0], [1], [0, 0, 1, 1], [], []>} : vector<128x1152xbf16>, vector<1152x128xbf16>, vector<128x128xf32> -> vector<128x128xf32>
    %40 = vector.extract_strided_slice %0 {offsets = [0, 1, 1, 0], sizes = [2, 8, 8, 128], strides = [1, 1, 1, 1]} : vector<2x9x9x128xf32> to vector<2x8x8x128xf32>
    %41 = vector.shape_cast %40 : vector<2x8x8x128xf32> to vector<128x128xf32>
    %c0_36 = arith.constant 0 : index
    %c0_37 = arith.constant 0 : index
    %42 = vector.load %arg5[%c0_36, %c0_37] : memref<128x128xf32, #tpu.memory_space<vmem>>, vector<128x128xf32>
    %cst_38 = arith.constant dense<0.000000e+00> : vector<128x128xf32>
    %43 = tpu.matmul %41, %42, %cst_38 {dimension_numbers = #tpu.dot_dimension_numbers<[1], [0], [0], [1], [0, 0, 1, 1], [], []>} : vector<128x128xf32>, vector<128x128xf32>, vector<128x128xf32> -> vector<128x128xf32>
    %c0_39 = arith.constant 0 : index
    %c0_40 = arith.constant 0 : index
    %44 = vector.load %arg6[%c0_39, %c0_40] : memref<1x128xf32, #tpu.memory_space<vmem>>, vector<1x128xf32>
    %45 = vector.broadcast %44 : vector<1x128xf32> to vector<128x128xf32>
    %46 = arith.addf %43, %45 : vector<128x128xf32>
    %47 = arith.addf %39, %46 : vector<128x128xf32>
    %48 = vector.shape_cast %47 : vector<128x128xf32> to vector<2x8x8x128xf32>
    %c0_41 = arith.constant 0 : index
    %c0_42 = arith.constant 0 : index
    %c0_43 = arith.constant 0 : index
    %c0_44 = arith.constant 0 : index
    %49 = vector.load %arg7[%c0_41, %c0_42, %c0_43, %c0_44] : memref<2x8x8x128xf32, #tpu.memory_space<vmem>>, vector<2x8x8x128xf32>
    tpu.vector_store %arg7[%c0_41, %c0_42, %c0_43, %c0_44], %48 {strides = array<i32>} : memref<2x8x8x128xf32, #tpu.memory_space<vmem>>, vector<2x8x8x128xf32>,
    return
  }
  func.func @transform_0(%arg0: i32) -> (i32, i32, i32, i32) {
    %c0_i32 = arith.constant 0 : i32
    %c0_i32_0 = arith.constant 0 : i32
    %c0_i32_1 = arith.constant 0 : i32
    %c0_i32_2 = arith.constant 0 : i32
    return %arg0, %c0_i32, %c0_i32_0, %c0_i32_1 : i32, i32, i32, i32
  }
  func.func @transform_1(%arg0: i32) -> (i32, i32) {
    %c0_i32 = arith.constant 0 : i32
    %c0_i32_0 = arith.constant 0 : i32
    %c0_i32_1 = arith.constant 0 : i32
    return %c0_i32, %c0_i32_0 : i32, i32
  }
  func.func @transform_2(%arg0: i32) -> (i32, i32) {
    %c0_i32 = arith.constant 0 : i32
    %c0_i32_0 = arith.constant 0 : i32
    %c0_i32_1 = arith.constant 0 : i32
    return %c0_i32, %c0_i32_0 : i32, i32
  }
  func.func @transform_3(%arg0: i32) -> (i32, i32) {
    %c0_i32 = arith.constant 0 : i32
    %c0_i32_0 = arith.constant 0 : i32
    %c0_i32_1 = arith.constant 0 : i32
    return %c0_i32, %c0_i32_0 : i32, i32
  }
  func.func @transform_4(%arg0: i32) -> (i32, i32) {
    %c0_i32 = arith.constant 0 : i32
    %c0_i32_0 = arith.constant 0 : i32
    %c0_i32_1 = arith.constant 0 : i32
    return %c0_i32, %c0_i32_0 : i32, i32
  }
  func.func @transform_5(%arg0: i32) -> (i32, i32) {
    %c0_i32 = arith.constant 0 : i32
    %c0_i32_0 = arith.constant 0 : i32
    %c0_i32_1 = arith.constant 0 : i32
    return %c0_i32, %c0_i32_0 : i32, i32
  }
  func.func @transform_6(%arg0: i32) -> (i32, i32, i32, i32) {
    %c0_i32 = arith.constant 0 : i32
    %c0_i32_0 = arith.constant 0 : i32
    %c0_i32_1 = arith.constant 0 : i32
    %c0_i32_2 = arith.constant 0 : i32
    return %arg0, %c0_i32, %c0_i32_0, %c0_i32_1 : i32, i32, i32, i32
  }
}

</mosaic_0001>

<llo_original>
// kernel: reduction_forward.1
$region0: #{reduction_forward.1}
  #allocation0 [shape = 'u32[]', space=smem, size = 0x4, offset = 0x4, fixed_abs, tag = 'smem constant byte address 0x4 - core index']
  #allocation1 [shape = 'u32[144,128]{1,0:T(1,128)}', space=vmem, size = 0x12000, scoped, tag = 'internal scratch']
  #allocation2 [shape = 'bf16[2,10,10,128]{3,2,1,0:T(8,128)(2,1)}', space=vmem, size = 0x14000, scoped, tag = 'scratch operand']
  %s0 = inlined_call_operand.vmem [shape: f32[2,9,9,128], index: 0, kind: input, shape index: {}]
  %s1 = inlined_call_operand.vmem [shape: bf16[512,128], index: 1, kind: input, shape index: {}]
  %s2 = inlined_call_operand.vmem [shape: f32[1,128], index: 2, kind: input, shape index: {}]
  %s3 = inlined_call_operand.vmem [shape: bf16[1152,128], index: 3, kind: input, shape index: {}]
  %s4 = inlined_call_operand.vmem [shape: f32[128,128], index: 4, kind: input, shape index: {}]
  %s5 = inlined_call_operand.vmem [shape: f32[1,128], index: 5, kind: input, shape index: {}]
  %s6 = inlined_call_operand.vmem [shape: f32[2,8,8,128], index: 6, kind: output, shape index: {}]
  %s7 = sld [smem:[#allocation0]]
  $region34: #{reduction_forward.1} parent=0
    _
  %s9 = ssub.s32 1, %s7
  %s10 = scalar_select 0, %s9, %s7
  // Predicated region
  $region2: #{reduction_forward.1} parent=0 // pred_check
    _
  $region3: #{reduction_forward.1} parent=0 // pred_check_branch
    %12 = sbr.rel (0) target = $region5
  $region4: #{reduction_forward.1} parent=0 // pred_region
    _
  $region5: #{reduction_forward.1} parent=0 // pred_fallthru
    _
  // Predicated region
  $region6: #{reduction_forward.1} parent=0 // pred_check
    _
  $region7: #{reduction_forward.1} parent=0 // pred_check_branch
    %14 = sbr.rel (0) target = $region9
  $region8: #{reduction_forward.1} parent=0 // pred_region
    _
  $region9: #{reduction_forward.1} parent=0 // pred_fallthru
    _
  // Predicated region
  $region10: #{reduction_forward.1} parent=0 // pred_check
    _
  $region11: #{reduction_forward.1} parent=0 // pred_check_branch
    %16 = sbr.rel (0) target = $region13
  $region12: #{reduction_forward.1} parent=0 // pred_region
    _
  $region13: #{reduction_forward.1} parent=0 // pred_fallthru
    _
  // Predicated region
  $region14: #{reduction_forward.1} parent=0 // pred_check
    _
  $region15: #{reduction_forward.1} parent=0 // pred_check_branch
    %18 = sbr.rel (0) target = $region17
  $region16: #{reduction_forward.1} parent=0 // pred_region
    _
  $region17: #{reduction_forward.1} parent=0 // pred_fallthru
    _
  // Predicated region
  $region18: #{reduction_forward.1} parent=0 // pred_check
    _
  $region19: #{reduction_forward.1} parent=0 // pred_check_branch
    %20 = sbr.rel (0) target = $region21
  $region20: #{reduction_forward.1} parent=0 // pred_region
    _
  $region21: #{reduction_forward.1} parent=0 // pred_fallthru
    _
  // Predicated region
  $region22: #{reduction_forward.1} parent=0 // pred_check
    _
  $region23: #{reduction_forward.1} parent=0 // pred_check_branch
    %22 = sbr.rel (0) target = $region25
  $region24: #{reduction_forward.1} parent=0 // pred_region
    _
  $region25: #{reduction_forward.1} parent=0 // pred_fallthru
    _
  %v24 = vld [vmem:[%s0] sm:$0xff]
  %v25 = vld [vmem:[%s0 + $0x8] sm:$0x1]
  %v26 = vld [vmem:[%s0 + $0x10] sm:$0xff]
  %v27 = vld [vmem:[%s0 + $0x18] sm:$0x1]
  %v28 = vld [vmem:[%s0 + $0x20] sm:$0xff]
  %v29 = vld [vmem:[%s0 + $0x28] sm:$0x1]
  %v30 = vld [vmem:[%s0 + $0x30] sm:$0xff]
  %v31 = vld [vmem:[%s0 + $0x38] sm:$0x1]
  %v32 = vld [vmem:[%s0 + $0x40] sm:$0xff]
  %v33 = vld [vmem:[%s0 + $0x48] sm:$0x1]
  %v34 = vld [vmem:[%s0 + $0x50] sm:$0xff]
  %v35 = vld [vmem:[%s0 + $0x58] sm:$0x1]
  %v36 = vld [vmem:[%s0 + $0x60] sm:$0xff]
  %v37 = vld [vmem:[%s0 + $0x68] sm:$0x1]
  %v38 = vld [vmem:[%s0 + $0x70] sm:$0xff]
  %v39 = vld [vmem:[%s0 + $0x78] sm:$0x1]
  %v40 = vld [vmem:[%s0 + $0x80] sm:$0xff]
  %v41 = vld [vmem:[%s0 + $0x88] sm:$0x1]
  %v42 = vld [vmem:[%s0 + $0x90] sm:$0xff]
  %v43 = vld [vmem:[%s0 + $0x98] sm:$0x1]
  %v44 = vld [vmem:[%s0 + $0xa0] sm:$0xff]
  %v45 = vld [vmem:[%s0 + $0xa8] sm:$0x1]
  %v46 = vld [vmem:[%s0 + $0xb0] sm:$0xff]
  %v47 = vld [vmem:[%s0 + $0xb8] sm:$0x1]
  %v48 = vld [vmem:[%s0 + $0xc0] sm:$0xff]
  %v49 = vld [vmem:[%s0 + $0xc8] sm:$0x1]
  %v50 = vld [vmem:[%s0 + $0xd0] sm:$0xff]
  %v51 = vld [vmem:[%s0 + $0xd8] sm:$0x1]
  %v52 = vld [vmem:[%s0 + $0xe0] sm:$0xff]
  %v53 = vld [vmem:[%s0 + $0xe8] sm:$0x1]
  %v54 = vld [vmem:[%s0 + $0xf0] sm:$0xff]
  %v55 = vld [vmem:[%s0 + $0xf8] sm:$0x1]
  %v56 = vld [vmem:[%s0 + $0x100] sm:$0xff]
  %v57 = vld [vmem:[%s0 + $0x108] sm:$0x1]
  %v58 = vld [vmem:[%s0 + $0x110] sm:$0xff]
  %v59 = vld [vmem:[%s0 + $0x118] sm:$0x1]
  %v60 = vmax.f32 %v24, 0.0
  %v61 = vmax.f32 %v25, 0.0
  %v62 = vmax.f32 %v26, 0.0
  %v63 = vmax.f32 %v27, 0.0
  %v64 = vmax.f32 %v28, 0.0
  %v65 = vmax.f32 %v29, 0.0
  %v66 = vmax.f32 %v30, 0.0
  %v67 = vmax.f32 %v31, 0.0
  %v68 = vmax.f32 %v32, 0.0
  %v69 = vmax.f32 %v33, 0.0
  %v70 = vmax.f32 %v34, 0.0
  %v71 = vmax.f32 %v35, 0.0
  %v72 = vmax.f32 %v36, 0.0
  %v73 = vmax.f32 %v37, 0.0
  %v74 = vmax.f32 %v38, 0.0
  %v75 = vmax.f32 %v39, 0.0
  %v76 = vmax.f32 %v40, 0.0
  %v77 = vmax.f32 %v41, 0.0
  %v78 = vmax.f32 %v42, 0.0
  %v79 = vmax.f32 %v43, 0.0
  %v80 = vmax.f32 %v44, 0.0
  %v81 = vmax.f32 %v45, 0.0
  %v82 = vmax.f32 %v46, 0.0
  %v83 = vmax.f32 %v47, 0.0
  %v84 = vmax.f32 %v48, 0.0
  %v85 = vmax.f32 %v49, 0.0
  %v86 = vmax.f32 %v50, 0.0
  %v87 = vmax.f32 %v51, 0.0
  %v88 = vmax.f32 %v52, 0.0
  %v89 = vmax.f32 %v53, 0.0
  %v90 = vmax.f32 %v54, 0.0
  %v91 = vmax.f32 %v55, 0.0
  %v92 = vmax.f32 %v56, 0.0
  %v93 = vmax.f32 %v57, 0.0
  %v94 = vmax.f32 %v58, 0.0
  %v95 = vmax.f32 %v59, 0.0
  %v96 = vpack.c.bf16 %v61, %v60
  %v97 = vpack.c.bf16 %v63, %v62
  %v98 = vpack.c.bf16 %v65, %v64
  %v99 = vpack.c.bf16 %v67, %v66
  %v100 = vpack.c.bf16 %v69, %v68
  %v101 = vpack.c.bf16 %v71, %v70
  %v102 = vpack.c.bf16 %v73, %v72
  %v103 = vpack.c.bf16 %v75, %v74
  %v104 = vpack.c.bf16 %v77, %v76
  %v105 = vpack.c.bf16 %v79, %v78
  %v106 = vpack.c.bf16 %v81, %v80
  %v107 = vpack.c.bf16 %v83, %v82
  %v108 = vpack.c.bf16 %v85, %v84
  %v109 = vpack.c.bf16 %v87, %v86
  %v110 = vpack.c.bf16 %v89, %v88
  %v111 = vpack.c.bf16 %v91, %v90
  %v112 = vpack.c.bf16 %v93, %v92
  %v113 = vpack.c.bf16 %v95, %v94
  %v115 = vshrl.u32 %v96, 16
  %v117 = vshll.u32 %v96, 16
  %v119 = vrot.slane %v117, 1
  %v120 = vor.u32 %v115, %v119
  %v122 = vshrl.u32 %v97, 16
  %v124 = vshll.u32 %v97, 16
  %v126 = vrot.slane %v124, 1
  %v127 = vor.u32 %v122, %v126
  %v129 = vshrl.u32 %v98, 16
  %v131 = vshll.u32 %v98, 16
  %v133 = vrot.slane %v131, 1
  %v134 = vor.u32 %v129, %v133
  %v136 = vshrl.u32 %v99, 16
  %v138 = vshll.u32 %v99, 16
  %v140 = vrot.slane %v138, 1
  %v141 = vor.u32 %v136, %v140
  %v143 = vshrl.u32 %v100, 16
  %v145 = vshll.u32 %v100, 16
  %v147 = vrot.slane %v145, 1
  %v148 = vor.u32 %v143, %v147
  %v150 = vshrl.u32 %v101, 16
  %v152 = vshll.u32 %v101, 16
  %v154 = vrot.slane %v152, 1
  %v155 = vor.u32 %v150, %v154
  %v157 = vshrl.u32 %v102, 16
  %v159 = vshll.u32 %v102, 16
  %v161 = vrot.slane %v159, 1
  %v162 = vor.u32 %v157, %v161
  %v164 = vshrl.u32 %v103, 16
  %v166 = vshll.u32 %v103, 16
  %v168 = vrot.slane %v166, 1
  %v169 = vor.u32 %v164, %v168
  %v171 = vshrl.u32 %v105, 16
  %v173 = vshll.u32 %v105, 16
  %v175 = vrot.slane %v173, 1
  %v176 = vor.u32 %v171, %v175
  %v178 = vshrl.u32 %v106, 16
  %v180 = vshll.u32 %v106, 16
  %v182 = vrot.slane %v180, 1
  %v183 = vor.u32 %v178, %v182
  %v185 = vshrl.u32 %v107, 16
  %v187 = vshll.u32 %v107, 16
  %v189 = vrot.slane %v187, 1
  %v190 = vor.u32 %v185, %v189
  %v192 = vshrl.u32 %v108, 16
  %v194 = vshll.u32 %v108, 16
  %v196 = vrot.slane %v194, 1
  %v197 = vor.u32 %v192, %v196
  %v199 = vshrl.u32 %v109, 16
  %v201 = vshll.u32 %v109, 16
  %v203 = vrot.slane %v201, 1
  %v204 = vor.u32 %v199, %v203
  %v206 = vshrl.u32 %v110, 16
  %v208 = vshll.u32 %v110, 16
  %v210 = vrot.slane %v208, 1
  %v211 = vor.u32 %v206, %v210
  %v213 = vshrl.u32 %v111, 16
  %v215 = vshll.u32 %v111, 16
  %v217 = vrot.slane %v215, 1
  %v218 = vor.u32 %v213, %v217
  %v220 = vshrl.u32 %v112, 16
  %v222 = vshll.u32 %v112, 16
  %v224 = vrot.slane %v222, 1
  %v225 = vor.u32 %v220, %v224
  %v227 = vshrl.u32 %v104, 16
  %v229 = vshll.u32 %v104, 16
  %v231 = vrot.slane %v229, 1
  %v232 = vor.u32 %v227, %v231
  %v234 = vshrl.u32 %v113, 16
  %v236 = vshll.u32 %v113, 16
  %v238 = vrot.slane %v236, 1
  %v239 = vor.u32 %v234, %v238
  %v258 = vunpack.c.l.b16 %v96
  %v259 = vunpack.c.l.b16 %v120
  %v260 = vunpack.c.l.b16 %v97
  %v261 = vunpack.c.l.b16 %v127
  %v262 = vunpack.c.l.b16 %v98
  %v263 = vunpack.c.l.b16 %v134
  %v264 = vunpack.c.l.b16 %v99
  %v265 = vunpack.c.l.b16 %v141
  %v266 = vunpack.c.l.b16 %v100
  %v267 = vunpack.c.l.b16 %v148
  %v268 = vunpack.c.l.b16 %v101
  %v269 = vunpack.c.l.b16 %v155
  %v270 = vunpack.c.l.b16 %v102
  %v271 = vunpack.c.l.b16 %v162
  %v272 = vunpack.c.l.b16 %v103
  %v273 = vunpack.c.l.b16 %v169
  %v274 = vunpack.c.l.b16 %v104
  %v275 = vunpack.c.l.b16 %v232
  %v276 = vunpack.c.l.b16 %v105
  %v277 = vunpack.c.l.b16 %v176
  %v278 = vunpack.c.l.b16 %v106
  %v279 = vunpack.c.l.b16 %v183
  %v280 = vunpack.c.l.b16 %v107
  %v281 = vunpack.c.l.b16 %v190
  %v282 = vunpack.c.l.b16 %v108
  %v283 = vunpack.c.l.b16 %v197
  %v284 = vunpack.c.l.b16 %v109
  %v285 = vunpack.c.l.b16 %v204
  %v286 = vunpack.c.l.b16 %v110
  %v287 = vunpack.c.l.b16 %v211
  %v288 = vunpack.c.l.b16 %v111
  %v289 = vunpack.c.l.b16 %v218
  %v290 = vunpack.c.l.b16 %v112
  %v291 = vunpack.c.l.b16 %v225
  %v292 = vunpack.c.l.b16 %v113
  %v293 = vunpack.c.l.b16 %v239
  %v294 = vld [vmem:[%s1] sm:$0xf]
  %v295 = vld [vmem:[%s1 + $0x4] sm:$0xf]
  %v296 = vld [vmem:[%s1 + $0x8] sm:$0xf]
  %v297 = vld [vmem:[%s1 + $0xc] sm:$0xf]
  %v298 = vld [vmem:[%s1 + $0x10] sm:$0xf]
  %v299 = vld [vmem:[%s1 + $0x14] sm:$0xf]
  %v300 = vld [vmem:[%s1 + $0x18] sm:$0xf]
  %v301 = vld [vmem:[%s1 + $0x1c] sm:$0xf]
  %v302 = vld [vmem:[%s1 + $0x20] sm:$0xf]
  %v303 = vld [vmem:[%s1 + $0x24] sm:$0xf]
  %v304 = vld [vmem:[%s1 + $0x28] sm:$0xf]
  %v305 = vld [vmem:[%s1 + $0x2c] sm:$0xf]
  %v306 = vld [vmem:[%s1 + $0x30] sm:$0xf]
  %v307 = vld [vmem:[%s1 + $0x34] sm:$0xf]
  %v308 = vld [vmem:[%s1 + $0x38] sm:$0xf]
  %v309 = vld [vmem:[%s1 + $0x3c] sm:$0xf]
  %v310 = vld [vmem:[%s1 + $0x40] sm:$0xf]
  %v311 = vld [vmem:[%s1 + $0x44] sm:$0xf]
  %v312 = vld [vmem:[%s1 + $0x48] sm:$0xf]
  %v313 = vld [vmem:[%s1 + $0x4c] sm:$0xf]
  %v314 = vld [vmem:[%s1 + $0x50] sm:$0xf]
  %v315 = vld [vmem:[%s1 + $0x54] sm:$0xf]
  %v316 = vld [vmem:[%s1 + $0x58] sm:$0xf]
  %v317 = vld [vmem:[%s1 + $0x5c] sm:$0xf]
  %v318 = vld [vmem:[%s1 + $0x60] sm:$0xf]
  %v319 = vld [vmem:[%s1 + $0x64] sm:$0xf]
  %v320 = vld [vmem:[%s1 + $0x68] sm:$0xf]
  %v321 = vld [vmem:[%s1 + $0x6c] sm:$0xf]
  %v322 = vld [vmem:[%s1 + $0x70] sm:$0xf]
  %v323 = vld [vmem:[%s1 + $0x74] sm:$0xf]
  %v324 = vld [vmem:[%s1 + $0x78] sm:$0xf]
  %v325 = vld [vmem:[%s1 + $0x7c] sm:$0xf]
  %v326 = vld [vmem:[%s1 + $0x80] sm:$0xf]
  %v327 = vld [vmem:[%s1 + $0x84] sm:$0xf]
  %v328 = vld [vmem:[%s1 + $0x88] sm:$0xf]
  %v329 = vld [vmem:[%s1 + $0x8c] sm:$0xf]
  %v330 = vld [vmem:[%s1 + $0x90] sm:$0xf]
  %v331 = vld [vmem:[%s1 + $0x94] sm:$0xf]
  %v332 = vld [vmem:[%s1 + $0x98] sm:$0xf]
  %v333 = vld [vmem:[%s1 + $0x9c] sm:$0xf]
  %v334 = vld [vmem:[%s1 + $0xa0] sm:$0xf]
  %v335 = vld [vmem:[%s1 + $0xa4] sm:$0xf]
  %v336 = vld [vmem:[%s1 + $0xa8] sm:$0xf]
  %v337 = vld [vmem:[%s1 + $0xac] sm:$0xf]
  %v338 = vld [vmem:[%s1 + $0xb0] sm:$0xf]
  %v339 = vld [vmem:[%s1 + $0xb4] sm:$0xf]
  %v340 = vld [vmem:[%s1 + $0xb8] sm:$0xf]
  %v341 = vld [vmem:[%s1 + $0xbc] sm:$0xf]
  %v342 = vld [vmem:[%s1 + $0xc0] sm:$0xf]
  %v343 = vld [vmem:[%s1 + $0xc4] sm:$0xf]
  %v344 = vld [vmem:[%s1 + $0xc8] sm:$0xf]
  %v345 = vld [vmem:[%s1 + $0xcc] sm:$0xf]
  %v346 = vld [vmem:[%s1 + $0xd0] sm:$0xf]
  %v347 = vld [vmem:[%s1 + $0xd4] sm:$0xf]
  %v348 = vld [vmem:[%s1 + $0xd8] sm:$0xf]
  %v349 = vld [vmem:[%s1 + $0xdc] sm:$0xf]
  %v350 = vld [vmem:[%s1 + $0xe0] sm:$0xf]
  %v351 = vld [vmem:[%s1 + $0xe4] sm:$0xf]
  %v352 = vld [vmem:[%s1 + $0xe8] sm:$0xf]
  %v353 = vld [vmem:[%s1 + $0xec] sm:$0xf]
  %v354 = vld [vmem:[%s1 + $0xf0] sm:$0xf]
  %v355 = vld [vmem:[%s1 + $0xf4] sm:$0xf]
  %v356 = vld [vmem:[%s1 + $0xf8] sm:$0xf]
  %v357 = vld [vmem:[%s1 + $0xfc] sm:$0xf]
  %v358 = vld [vmem:[%s2] sm:$0x1]
  %v360 = vlaneseq
  %v361 = vshrl.u32 %v360, 7
  %v362 = vsub.s32 0, %v361
  %v363 = vrot.slane %v358, %v362
  %v365 = vpack.c.b16 %v260, %v258
  %v366 = vpack.c.b16 %v261, %v259
  %v367 = vpack.c.b16 %v262, %v260
  %v368 = vpack.c.b16 %v263, %v261
  %v369 = vpack.c.b16 %v264, %v262
  %v370 = vpack.c.b16 %v265, %v263
  %v371 = vpack.c.b16 %v266, %v264
  %v372 = vpack.c.b16 %v267, %v265
  %v373 = vpack.c.b16 %v268, %v266
  %v374 = vpack.c.b16 %v269, %v267
  %v375 = vpack.c.b16 %v270, %v268
  %v376 = vpack.c.b16 %v271, %v269
  %v377 = vpack.c.b16 %v272, %v270
  %v378 = vpack.c.b16 %v273, %v271
  %v379 = vpack.c.b16 %v274, %v272
  %v380 = vpack.c.b16 %v275, %v273
  %v381 = vpack.c.b16 %v278, %v276
  %v382 = vpack.c.b16 %v279, %v277
  %v383 = vpack.c.b16 %v280, %v278
  %v384 = vpack.c.b16 %v281, %v279
  %v385 = vpack.c.b16 %v282, %v280
  %v386 = vpack.c.b16 %v283, %v281
  %v387 = vpack.c.b16 %v284, %v282
  %v388 = vpack.c.b16 %v285, %v283
  %v389 = vpack.c.b16 %v286, %v284
  %v390 = vpack.c.b16 %v287, %v285
  %v391 = vpack.c.b16 %v288, %v286
  %v392 = vpack.c.b16 %v289, %v287
  %v393 = vpack.c.b16 %v290, %v288
  %v394 = vpack.c.b16 %v291, %v289
  %v395 = vpack.c.b16 %v292, %v290
  %v396 = vpack.c.b16 %v293, %v291
  %v493 = vunpack.c.l.b16 %v294
  %v494 = vunpack.c.l.b16 %v295
  %v495 = vunpack.c.l.b16 %v296
  %v496 = vunpack.c.l.b16 %v297
  %v497 = vunpack.c.l.b16 %v298
  %v498 = vunpack.c.l.b16 %v299
  %v499 = vunpack.c.l.b16 %v300
  %v500 = vunpack.c.l.b16 %v301
  %v501 = vunpack.c.l.b16 %v302
  %v502 = vunpack.c.l.b16 %v303
  %v503 = vunpack.c.l.b16 %v304
  %v504 = vunpack.c.l.b16 %v305
  %v505 = vunpack.c.l.b16 %v306
  %v506 = vunpack.c.l.b16 %v307
  %v507 = vunpack.c.l.b16 %v308
  %v508 = vunpack.c.l.b16 %v309
  %v509 = vunpack.c.l.b16 %v310
  %v510 = vunpack.c.l.b16 %v311
  %v511 = vunpack.c.l.b16 %v312
  %v512 = vunpack.c.l.b16 %v313
  %v513 = vunpack.c.l.b16 %v314
  %v514 = vunpack.c.l.b16 %v315
  %v515 = vunpack.c.l.b16 %v316
  %v516 = vunpack.c.l.b16 %v317
  %v517 = vunpack.c.l.b16 %v318
  %v518 = vunpack.c.l.b16 %v319
  %v519 = vunpack.c.l.b16 %v320
  %v520 = vunpack.c.l.b16 %v321
  %v521 = vunpack.c.l.b16 %v322
  %v522 = vunpack.c.l.b16 %v323
  %v523 = vunpack.c.l.b16 %v324
  %v524 = vunpack.c.l.b16 %v325
  %v525 = vunpack.c.l.b16 %v326
  %v526 = vunpack.c.l.b16 %v327
  %v527 = vunpack.c.l.b16 %v328
  %v528 = vunpack.c.l.b16 %v329
  %v529 = vunpack.c.l.b16 %v330
  %v530 = vunpack.c.l.b16 %v331
  %v531 = vunpack.c.l.b16 %v332
  %v532 = vunpack.c.l.b16 %v333
  %v533 = vunpack.c.l.b16 %v334
  %v534 = vunpack.c.l.b16 %v335
  %v535 = vunpack.c.l.b16 %v336
  %v536 = vunpack.c.l.b16 %v337
  %v537 = vunpack.c.l.b16 %v338
  %v538 = vunpack.c.l.b16 %v339
  %v539 = vunpack.c.l.b16 %v340
  %v540 = vunpack.c.l.b16 %v341
  %v541 = vunpack.c.l.b16 %v342
  %v542 = vunpack.c.l.b16 %v343
  %v543 = vunpack.c.l.b16 %v344
  %v544 = vunpack.c.l.b16 %v345
  %v545 = vunpack.c.l.b16 %v346
  %v546 = vunpack.c.l.b16 %v347
  %v547 = vunpack.c.l.b16 %v348
  %v548 = vunpack.c.l.b16 %v349
  %v549 = vunpack.c.l.b16 %v350
  %v550 = vunpack.c.l.b16 %v351
  %v551 = vunpack.c.l.b16 %v352
  %v552 = vunpack.c.l.b16 %v353
  %v553 = vunpack.c.l.b16 %v354
  %v554 = vunpack.c.l.b16 %v355
  %v555 = vunpack.c.l.b16 %v356
  %v556 = vunpack.c.l.b16 %v357
  %v557 = vpack.c.b16 %v494, %v493
  %v558 = vpack.c.b16 %v496, %v495
  %v559 = vpack.c.b16 %v498, %v497
  %v560 = vpack.c.b16 %v500, %v499
  %v561 = vpack.c.b16 %v502, %v501
  %v562 = vpack.c.b16 %v504, %v503
  %v563 = vpack.c.b16 %v506, %v505
  %v564 = vpack.c.b16 %v508, %v507
  %v565 = vpack.c.b16 %v510, %v509
  %v566 = vpack.c.b16 %v512, %v511
  %v567 = vpack.c.b16 %v514, %v513
  %v568 = vpack.c.b16 %v516, %v515
  %v569 = vpack.c.b16 %v518, %v517
  %v570 = vpack.c.b16 %v520, %v519
  %v571 = vpack.c.b16 %v522, %v521
  %v572 = vpack.c.b16 %v524, %v523
  %v573 = vpack.c.b16 %v526, %v525
  %v574 = vpack.c.b16 %v528, %v527
  %v575 = vpack.c.b16 %v530, %v529
  %v576 = vpack.c.b16 %v532, %v531
  %v577 = vpack.c.b16 %v534, %v533
  %v578 = vpack.c.b16 %v536, %v535
  %v579 = vpack.c.b16 %v538, %v537
  %v580 = vpack.c.b16 %v540, %v539
  %v581 = vpack.c.b16 %v542, %v541
  %v582 = vpack.c.b16 %v544, %v543
  %v583 = vpack.c.b16 %v546, %v545
  %v584 = vpack.c.b16 %v548, %v547
  %v585 = vpack.c.b16 %v550, %v549
  %v586 = vpack.c.b16 %v552, %v551
  %v587 = vpack.c.b16 %v554, %v553
  %v588 = vpack.c.b16 %v556, %v555
  %621 = vmatprep.subr.bf16.mxu0 0
  %622 = vmatpush1.bf16.msra.mxu0 %v557
  %623 = vmatprep.subr.bf16.mxu0 0
  %624 = vmatpush1.bf16.msra.mxu0 %v558
  %625 = vmatprep.subr.bf16.mxu0 0
  %626 = vmatpush1.bf16.msra.mxu0 %v559
  %627 = vmatprep.subr.bf16.mxu0 0
  %628 = vmatpush1.bf16.msra.mxu0 %v560
  %629 = vmatprep.subr.bf16.mxu0 0
  %630 = vmatpush1.bf16.msra.mxu0 %v561
  %631 = vmatprep.subr.bf16.mxu0 0
  %632 = vmatpush1.bf16.msra.mxu0 %v562
  %633 = vmatprep.subr.bf16.mxu0 0
  %634 = vmatpush1.bf16.msra.mxu0 %v563
  %635 = vmatprep.subr.bf16.mxu0 0
  %636 = vmatpush1.bf16.msra.mxu0 %v564
  %637 = vmatprep.subr.bf16.mxu0 0
  %638 = vmatpush1.bf16.msra.mxu0 %v565
  %639 = vmatprep.subr.bf16.mxu0 0
  %640 = vmatpush1.bf16.msra.mxu0 %v566
  %641 = vmatprep.subr.bf16.mxu0 0
  %642 = vmatpush1.bf16.msra.mxu0 %v567
  %643 = vmatprep.subr.bf16.mxu0 0
  %644 = vmatpush1.bf16.msra.mxu0 %v568
  %645 = vmatprep.subr.bf16.mxu0 0
  %646 = vmatpush1.bf16.msra.mxu0 %v569
  %647 = vmatprep.subr.bf16.mxu0 0
  %648 = vmatpush1.bf16.msra.mxu0 %v570
  %649 = vmatprep.subr.bf16.mxu0 0
  %650 = vmatpush1.bf16.msra.mxu0 %v571
  %651 = vmatprep.subr.bf16.mxu0 0
  %652 = vmatpush1.bf16.msra.mxu0 %v572
  %653 = vmatprep.mubr.bf16.mxu0 %v366
  %654 = vmatmul.mubr.bf16.gmra.mrb[0].mxu0 %v365
  %v655 = vpop.f32.mrb[0].mxu0
  %v656 = vadd.f32 %v363, %v655
  %v657 = vpop.f32.mrb[0].mxu0
  %v658 = vpop.f32.mrb[0].mxu0
  %v659 = vadd.f32 %v363, %v658
  %v660 = vpop.f32.mrb[0].mxu0
  %661 = vmatprep.mubr.bf16.mxu0 %v370
  %662 = vmatmul.mubr.bf16.gmra.mrb[0].mxu0 %v369
  %v663 = vpop.f32.mrb[0].mxu0
  %v664 = vadd.f32 %v363, %v663
  %v665 = vpop.f32.mrb[0].mxu0
  %v666 = vpop.f32.mrb[0].mxu0
  %v667 = vadd.f32 %v363, %v666
  %v668 = vpop.f32.mrb[0].mxu0
  %669 = vmatprep.mubr.bf16.mxu0 %v374
  %670 = vmatmul.mubr.bf16.gmra.mrb[0].mxu0 %v373
  %v671 = vpop.f32.mrb[0].mxu0
  %v672 = vadd.f32 %v363, %v671
  %v673 = vpop.f32.mrb[0].mxu0
  %v674 = vpop.f32.mrb[0].mxu0
  %v675 = vadd.f32 %v363, %v674
  %v676 = vpop.f32.mrb[0].mxu0
  %677 = vmatprep.mubr.bf16.mxu0 %v378
  %678 = vmatmul.mubr.bf16.gmra.mrb[0].mxu0 %v377
  %v679 = vpop.f32.mrb[0].mxu0
  %v680 = vadd.f32 %v363, %v679
  %v681 = vpop.f32.mrb[0].mxu0
  %v682 = vpop.f32.mrb[0].mxu0
  %v683 = vadd.f32 %v363, %v682
  %v684 = vpop.f32.mrb[0].mxu0
  %685 = vmatprep.mubr.bf16.mxu0 %v382
  %686 = vmatmul.mubr.bf16.gmra.mrb[0].mxu0 %v381
  %v687 = vpop.f32.mrb[0].mxu0
  %v688 = vadd.f32 %v363, %v687
  %v689 = vpop.f32.mrb[0].mxu0
  %v690 = vpop.f32.mrb[0].mxu0
  %v691 = vadd.f32 %v363, %v690
  %v692 = vpop.f32.mrb[0].mxu0
  %693 = vmatprep.mubr.bf16.mxu0 %v386
  %694 = vmatmul.mubr.bf16.gmra.mrb[0].mxu0 %v385
  %v695 = vpop.f32.mrb[0].mxu0
  %v696 = vadd.f32 %v363, %v695
  %v697 = vpop.f32.mrb[0].mxu0
  %v698 = vpop.f32.mrb[0].mxu0
  %v699 = vadd.f32 %v363, %v698
  %v700 = vpop.f32.mrb[0].mxu0
  %701 = vmatprep.mubr.bf16.mxu0 %v390
  %702 = vmatmul.mubr.bf16.gmra.mrb[0].mxu0 %v389
  %v703 = vpop.f32.mrb[0].mxu0
  %v704 = vadd.f32 %v363, %v703
  %v705 = vpop.f32.mrb[0].mxu0
  %v706 = vpop.f32.mrb[0].mxu0
  %v707 = vadd.f32 %v363, %v706
  %v708 = vpop.f32.mrb[0].mxu0
  %709 = vmatprep.mubr.bf16.mxu0 %v394
  %710 = vmatmul.mubr.bf16.gmra.mrb[0].mxu0 %v393
  %v711 = vpop.f32.mrb[0].mxu0
  %v712 = vadd.f32 %v363, %v711
  %v713 = vpop.f32.mrb[0].mxu0
  %v714 = vpop.f32.mrb[0].mxu0
  %v715 = vadd.f32 %v363, %v714
  %v716 = vpop.f32.mrb[0].mxu0
  %717 = vdwg.mxu0
  %718 = vmatprep.subr.bf16.mxu0 0
  %719 = vmatpush1.bf16.msra.mxu0 %v573
  %720 = vmatprep.subr.bf16.mxu0 0
  %721 = vmatpush1.bf16.msra.mxu0 %v574
  %722 = vmatprep.subr.bf16.mxu0 0
  %723 = vmatpush1.bf16.msra.mxu0 %v575
  %724 = vmatprep.subr.bf16.mxu0 0
  %725 = vmatpush1.bf16.msra.mxu0 %v576
  %726 = vmatprep.subr.bf16.mxu0 0
  %727 = vmatpush1.bf16.msra.mxu0 %v577
  %728 = vmatprep.subr.bf16.mxu0 0
  %729 = vmatpush1.bf16.msra.mxu0 %v578
  %730 = vmatprep.subr.bf16.mxu0 0
  %731 = vmatpush1.bf16.msra.mxu0 %v579
  %732 = vmatprep.subr.bf16.mxu0 0
  %733 = vmatpush1.bf16.msra.mxu0 %v580
  %734 = vmatprep.subr.bf16.mxu0 0
  %735 = vmatpush1.bf16.msra.mxu0 %v581
  %736 = vmatprep.subr.bf16.mxu0 0
  %737 = vmatpush1.bf16.msra.mxu0 %v582
  %738 = vmatprep.subr.bf16.mxu0 0
  %739 = vmatpush1.bf16.msra.mxu0 %v583
  %740 = vmatprep.subr.bf16.mxu0 0
  %741 = vmatpush1.bf16.msra.mxu0 %v584
  %742 = vmatprep.subr.bf16.mxu0 0
  %743 = vmatpush1.bf16.msra.mxu0 %v585
  %744 = vmatprep.subr.bf16.mxu0 0
  %745 = vmatpush1.bf16.msra.mxu0 %v586
  %746 = vmatprep.subr.bf16.mxu0 0
  %747 = vmatpush1.bf16.msra.mxu0 %v587
  %748 = vmatprep.subr.bf16.mxu0 0
  %749 = vmatpush1.bf16.msra.mxu0 %v588
  %750 = vmatprep.mubr.bf16.mxu0 %v368
  %751 = vmatmul.mubr.bf16.gmra.mrb[0].mxu0 %v367
  %v752 = vpop.f32.mrb[0].mxu0
  %v753 = vadd.f32 %v656, %v752
  %v754 = vpop.f32.mrb[0].mxu0
  %v755 = vpop.f32.mrb[0].mxu0
  %v756 = vadd.f32 %v659, %v755
  %v757 = vpop.f32.mrb[0].mxu0
  %758 = vmatprep.mubr.bf16.mxu0 %v372
  %759 = vmatmul.mubr.bf16.gmra.mrb[0].mxu0 %v371
  %v760 = vpop.f32.mrb[0].mxu0
  %v761 = vadd.f32 %v664, %v760
  %v762 = vpop.f32.mrb[0].mxu0
  %v763 = vpop.f32.mrb[0].mxu0
  %v764 = vadd.f32 %v667, %v763
  %v765 = vpop.f32.mrb[0].mxu0
  %766 = vmatprep.mubr.bf16.mxu0 %v376
  %767 = vmatmul.mubr.bf16.gmra.mrb[0].mxu0 %v375
  %v768 = vpop.f32.mrb[0].mxu0
  %v769 = vadd.f32 %v672, %v768
  %v770 = vpop.f32.mrb[0].mxu0
  %v771 = vpop.f32.mrb[0].mxu0
  %v772 = vadd.f32 %v675, %v771
  %v773 = vpop.f32.mrb[0].mxu0
  %774 = vmatprep.mubr.bf16.mxu0 %v380
  %775 = vmatmul.mubr.bf16.gmra.mrb[0].mxu0 %v379
  %v776 = vpop.f32.mrb[0].mxu0
  %v777 = vadd.f32 %v680, %v776
  %v778 = vpop.f32.mrb[0].mxu0
  %v779 = vpop.f32.mrb[0].mxu0
  %v780 = vadd.f32 %v683, %v779
  %v781 = vpop.f32.mrb[0].mxu0
  %782 = vmatprep.mubr.bf16.mxu0 %v384
  %783 = vmatmul.mubr.bf16.gmra.mrb[0].mxu0 %v383
  %v784 = vpop.f32.mrb[0].mxu0
  %v785 = vadd.f32 %v688, %v784
  %v786 = vpop.f32.mrb[0].mxu0
  %v787 = vpop.f32.mrb[0].mxu0
  %v788 = vadd.f32 %v691, %v787
  %v789 = vpop.f32.mrb[0].mxu0
  %790 = vmatprep.mubr.bf16.mxu0 %v388
  %791 = vmatmul.mubr.bf16.gmra.mrb[0].mxu0 %v387
  %v792 = vpop.f32.mrb[0].mxu0
  %v793 = vadd.f32 %v696, %v792
  %v794 = vpop.f32.mrb[0].mxu0
  %v795 = vpop.f32.mrb[0].mxu0
  %v796 = vadd.f32 %v699, %v795
  %v797 = vpop.f32.mrb[0].mxu0
  %798 = vmatprep.mubr.bf16.mxu0 %v392
  %799 = vmatmul.mubr.bf16.gmra.mrb[0].mxu0 %v391
  %v800 = vpop.f32.mrb[0].mxu0
  %v801 = vadd.f32 %v704, %v800
  %v802 = vpop.f32.mrb[0].mxu0
  %v803 = vpop.f32.mrb[0].mxu0
  %v804 = vadd.f32 %v707, %v803
  %v805 = vpop.f32.mrb[0].mxu0
  %806 = vmatprep.mubr.bf16.mxu0 %v396
  %807 = vmatmul.mubr.bf16.gmra.mrb[0].mxu0 %v395
  %v808 = vpop.f32.mrb[0].mxu0
  %v809 = vadd.f32 %v712, %v808
  %v810 = vpop.f32.mrb[0].mxu0
  %v811 = vpop.f32.mrb[0].mxu0
  %v812 = vadd.f32 %v715, %v811
  %v813 = vpop.f32.mrb[0].mxu0
  %814 = vdwg.mxu0
  %815 = vst [vmem:[#allocation2] sm:$0xf] 0
  %816 = vst [vmem:[#allocation2 + $0x4] sm:$0x1] 0
  %817 = vst [vmem:[#allocation2 + $0x50] sm:$0xf] 0
  %818 = vst [vmem:[#allocation2 + $0x54] sm:$0x1] 0
  %s819 = scalar_lea.vmem [#allocation2], 72
  %820 = vst [vmem:[%s819] sm:$0xf] 0
  %821 = vst [vmem:[%s819 + $0x4] sm:$0x1] 0
  %822 = vst [vmem:[%s819 + $0x50] sm:$0xf] 0
  %823 = vst [vmem:[%s819 + $0x54] sm:$0x1] 0
  %s824 = scalar_lea.vmem [#allocation2], 8
  %vm825 = vcmask 1040384
  %vm826 = vsmask.f32 256
  %vm827 = vmand %vm825, %vm826
  %v828 = vld [vmem:[%s824] sm:$0x1]
  %v829 = vsel %vm827, 0, %v828
  %830 = vst [vmem:[%s824] sm:$0x1] %v829
  %v831 = vld [vmem:[%s824 + $0x8] sm:$0x1]
  %v832 = vsel %vm827, 0, %v831
  %833 = vst [vmem:[%s824 + $0x8] sm:$0x1] %v832
  %v834 = vld [vmem:[%s824 + $0x10] sm:$0x1]
  %v835 = vsel %vm827, 0, %v834
  %836 = vst [vmem:[%s824 + $0x10] sm:$0x1] %v835
  %v837 = vld [vmem:[%s824 + $0x18] sm:$0x1]
  %v838 = vsel %vm827, 0, %v837
  %839 = vst [vmem:[%s824 + $0x18] sm:$0x1] %v838
  %v840 = vld [vmem:[%s824 + $0x20] sm:$0x1]
  %v841 = vsel %vm827, 0, %v840
  %842 = vst [vmem:[%s824 + $0x20] sm:$0x1] %v841
  %v843 = vld [vmem:[%s824 + $0x28] sm:$0x1]
  %v844 = vsel %vm827, 0, %v843
  %845 = vst [vmem:[%s824 + $0x28] sm:$0x1] %v844
  %v846 = vld [vmem:[%s824 + $0x30] sm:$0x1]
  %v847 = vsel %vm827, 0, %v846
  %848 = vst [vmem:[%s824 + $0x30] sm:$0x1] %v847
  %v849 = vld [vmem:[%s824 + $0x38] sm:$0x1]
  %v850 = vsel %vm827, 0, %v849
  %851 = vst [vmem:[%s824 + $0x38] sm:$0x1] %v850
  %v852 = vld [vmem:[%s824 + $0x50] sm:$0x1]
  %v853 = vsel %vm827, 0, %v852
  %854 = vst [vmem:[%s824 + $0x50] sm:$0x1] %v853
  %v855 = vld [vmem:[%s824 + $0x58] sm:$0x1]
  %v856 = vsel %vm827, 0, %v855
  %857 = vst [vmem:[%s824 + $0x58] sm:$0x1] %v856
  %v858 = vld [vmem:[%s824 + $0x60] sm:$0x1]
  %v859 = vsel %vm827, 0, %v858
  %860 = vst [vmem:[%s824 + $0x60] sm:$0x1] %v859
  %v861 = vld [vmem:[%s824 + $0x68] sm:$0x1]
  %v862 = vsel %vm827, 0, %v861
  %863 = vst [vmem:[%s824 + $0x68] sm:$0x1] %v862
  %v864 = vld [vmem:[%s824 + $0x70] sm:$0x1]
  %v865 = vsel %vm827, 0, %v864
  %866 = vst [vmem:[%s824 + $0x70] sm:$0x1] %v865
  %v867 = vld [vmem:[%s824 + $0x78] sm:$0x1]
  %v868 = vsel %vm827, 0, %v867
  %869 = vst [vmem:[%s824 + $0x78] sm:$0x1] %v868
  %v870 = vld [vmem:[%s824 + $0x80] sm:$0x1]
  %v871 = vsel %vm827, 0, %v870
  %872 = vst [vmem:[%s824 + $0x80] sm:$0x1] %v871
  %v873 = vld [vmem:[%s824 + $0x88] sm:$0x1]
  %v874 = vsel %vm827, 0, %v873
  %875 = vst [vmem:[%s824 + $0x88] sm:$0x1] %v874
  %vm876 = vsmask.f32 7938
  %vm877 = vmand %vm825, %vm876
  %v878 = vld [vmem:[%s824 + $0x4] sm:$0x1]
  %v879 = vsel %vm877, 0, %v878
  %880 = vst [vmem:[%s824 + $0x4] sm:$0x1] %v879
  %v881 = vld [vmem:[%s824 + $0xc] sm:$0x1]
  %v882 = vsel %vm877, 0, %v881
  %883 = vst [vmem:[%s824 + $0xc] sm:$0x1] %v882
  %v884 = vld [vmem:[%s824 + $0x14] sm:$0x1]
  %v885 = vsel %vm877, 0, %v884
  %886 = vst [vmem:[%s824 + $0x14] sm:$0x1] %v885
  %v887 = vld [vmem:[%s824 + $0x1c] sm:$0x1]
  %v888 = vsel %vm877, 0, %v887
  %889 = vst [vmem:[%s824 + $0x1c] sm:$0x1] %v888
  %v890 = vld [vmem:[%s824 + $0x24] sm:$0x1]
  %v891 = vsel %vm877, 0, %v890
  %892 = vst [vmem:[%s824 + $0x24] sm:$0x1] %v891
  %v893 = vld [vmem:[%s824 + $0x2c] sm:$0x1]
  %v894 = vsel %vm877, 0, %v893
  %895 = vst [vmem:[%s824 + $0x2c] sm:$0x1] %v894
  %v896 = vld [vmem:[%s824 + $0x34] sm:$0x1]
  %v897 = vsel %vm877, 0, %v896
  %898 = vst [vmem:[%s824 + $0x34] sm:$0x1] %v897
  %v899 = vld [vmem:[%s824 + $0x3c] sm:$0x1]
  %v900 = vsel %vm877, 0, %v899
  %901 = vst [vmem:[%s824 + $0x3c] sm:$0x1] %v900
  %v902 = vld [vmem:[%s824 + $0x54] sm:$0x1]
  %v903 = vsel %vm877, 0, %v902
  %904 = vst [vmem:[%s824 + $0x54] sm:$0x1] %v903
  %v905 = vld [vmem:[%s824 + $0x5c] sm:$0x1]
  %v906 = vsel %vm877, 0, %v905
  %907 = vst [vmem:[%s824 + $0x5c] sm:$0x1] %v906
  %v908 = vld [vmem:[%s824 + $0x64] sm:$0x1]
  %v909 = vsel %vm877, 0, %v908
  %910 = vst [vmem:[%s824 + $0x64] sm:$0x1] %v909
  %v911 = vld [vmem:[%s824 + $0x6c] sm:$0x1]
  %v912 = vsel %vm877, 0, %v911
  %913 = vst [vmem:[%s824 + $0x6c] sm:$0x1] %v912
  %v914 = vld [vmem:[%s824 + $0x74] sm:$0x1]
  %v915 = vsel %vm877, 0, %v914
  %916 = vst [vmem:[%s824 + $0x74] sm:$0x1] %v915
  %v917 = vld [vmem:[%s824 + $0x7c] sm:$0x1]
  %v918 = vsel %vm877, 0, %v917
  %919 = vst [vmem:[%s824 + $0x7c] sm:$0x1] %v918
  %v920 = vld [vmem:[%s824 + $0x84] sm:$0x1]
  %v921 = vsel %vm877, 0, %v920
  %922 = vst [vmem:[%s824 + $0x84] sm:$0x1] %v921
  %v923 = vld [vmem:[%s824 + $0x8c] sm:$0x1]
  %v924 = vsel %vm877, 0, %v923
  %925 = vst [vmem:[%s824 + $0x8c] sm:$0x1] %v924
  %v926 = vmax.f32 %v753, 0.0
  %v927 = vmax.f32 %v756, 0.0
  %v928 = vmax.f32 %v761, 0.0
  %v929 = vmax.f32 %v764, 0.0
  %v930 = vmax.f32 %v769, 0.0
  %v931 = vmax.f32 %v772, 0.0
  %v932 = vmax.f32 %v777, 0.0
  %v933 = vmax.f32 %v780, 0.0
  %v934 = vmax.f32 %v785, 0.0
  %v935 = vmax.f32 %v788, 0.0
  %v936 = vmax.f32 %v793, 0.0
  %v937 = vmax.f32 %v796, 0.0
  %v938 = vmax.f32 %v801, 0.0
  %v939 = vmax.f32 %v804, 0.0
  %v940 = vmax.f32 %v809, 0.0
  %v941 = vmax.f32 %v812, 0.0
  %v942 = vpack.c.bf16 %v927, %v926
  %v943 = vpack.c.bf16 %v929, %v928
  %v944 = vpack.c.bf16 %v931, %v930
  %v945 = vpack.c.bf16 %v933, %v932
  %v946 = vpack.c.bf16 %v935, %v934
  %v947 = vpack.c.bf16 %v937, %v936
  %v948 = vpack.c.bf16 %v939, %v938
  %v949 = vpack.c.bf16 %v941, %v940
  %v958 = vunpack.c.l.b16 %v942
  %v959 = vunpack.c.h.b16 %v942
  %v960 = vunpack.c.l.b16 %v943
  %v961 = vunpack.c.h.b16 %v943
  %v962 = vunpack.c.l.b16 %v944
  %v963 = vunpack.c.h.b16 %v944
  %v964 = vunpack.c.l.b16 %v945
  %v965 = vunpack.c.h.b16 %v945
  %v966 = vunpack.c.l.b16 %v946
  %v967 = vunpack.c.h.b16 %v946
  %v968 = vunpack.c.l.b16 %v947
  %v969 = vunpack.c.h.b16 %v947
  %v970 = vunpack.c.l.b16 %v948
  %v971 = vunpack.c.h.b16 %v948
  %v972 = vunpack.c.l.b16 %v949
  %v973 = vunpack.c.h.b16 %v949
  %v974 = vpack.c.b16 %v958, %v958
  %v975 = vpack.c.b16 %v959, %v959
  %v976 = vpack.c.b16 %v960, %v960
  %v977 = vpack.c.b16 %v961, %v961
  %v978 = vpack.c.b16 %v962, %v962
  %v979 = vpack.c.b16 %v963, %v963
  %v980 = vpack.c.b16 %v964, %v964
  %v981 = vpack.c.b16 %v965, %v965
  %v982 = vpack.c.b16 %v966, %v966
  %v983 = vpack.c.b16 %v967, %v967
  %v984 = vpack.c.b16 %v968, %v968
  %v985 = vpack.c.b16 %v969, %v969
  %v986 = vpack.c.b16 %v970, %v970
  %v987 = vpack.c.b16 %v971, %v971
  %v988 = vpack.c.b16 %v972, %v972
  %v989 = vpack.c.b16 %v973, %v973
  %v991 = vshrl.u32 %v974, 16
  %v993 = vrot.slane %v991, 7
  %v994 = vshll.u32 %v974, 16
  %v996 = vor.u32 %v993, %v994
  %v997 = vrot.slane %v993, 4
  %v999 = vshrl.u32 %v975, 16
  %v1001 = vrot.slane %v999, 7
  %v1002 = vshll.u32 %v975, 16
  %v1004 = vor.u32 %v1001, %v1002
  %v1005 = vrot.slane %v1001, 4
  %v1007 = vshrl.u32 %v976, 16
  %v1009 = vrot.slane %v1007, 7
  %v1010 = vshll.u32 %v976, 16
  %v1012 = vor.u32 %v1009, %v1010
  %v1013 = vrot.slane %v1009, 4
  %v1015 = vshrl.u32 %v977, 16
  %v1017 = vrot.slane %v1015, 7
  %v1018 = vshll.u32 %v977, 16
  %v1020 = vor.u32 %v1017, %v1018
  %v1021 = vrot.slane %v1017, 4
  %v1023 = vshrl.u32 %v978, 16
  %v1025 = vrot.slane %v1023, 7
  %v1026 = vshll.u32 %v978, 16
  %v1028 = vor.u32 %v1025, %v1026
  %v1029 = vrot.slane %v1025, 4
  %v1031 = vshrl.u32 %v979, 16
  %v1033 = vrot.slane %v1031, 7
  %v1034 = vshll.u32 %v979, 16
  %v1036 = vor.u32 %v1033, %v1034
  %v1037 = vrot.slane %v1033, 4
  %v1039 = vshrl.u32 %v980, 16
  %v1041 = vrot.slane %v1039, 7
  %v1042 = vshll.u32 %v980, 16
  %v1044 = vor.u32 %v1041, %v1042
  %v1045 = vrot.slane %v1041, 4
  %v1047 = vshrl.u32 %v981, 16
  %v1049 = vrot.slane %v1047, 7
  %v1050 = vshll.u32 %v981, 16
  %v1052 = vor.u32 %v1049, %v1050
  %v1053 = vrot.slane %v1049, 4
  %v1055 = vshrl.u32 %v982, 16
  %v1057 = vrot.slane %v1055, 7
  %v1058 = vshll.u32 %v982, 16
  %v1060 = vor.u32 %v1057, %v1058
  %v1061 = vrot.slane %v1057, 4
  %v1063 = vshrl.u32 %v983, 16
  %v1065 = vrot.slane %v1063, 7
  %v1066 = vshll.u32 %v983, 16
  %v1068 = vor.u32 %v1065, %v1066
  %v1069 = vrot.slane %v1065, 4
  %v1071 = vshrl.u32 %v984, 16
  %v1073 = vrot.slane %v1071, 7
  %v1074 = vshll.u32 %v984, 16
  %v1076 = vor.u32 %v1073, %v1074
  %v1077 = vrot.slane %v1073, 4
  %v1079 = vshrl.u32 %v985, 16
  %v1081 = vrot.slane %v1079, 7
  %v1082 = vshll.u32 %v985, 16
  %v1084 = vor.u32 %v1081, %v1082
  %v1085 = vrot.slane %v1081, 4
  %v1087 = vshrl.u32 %v986, 16
  %v1089 = vrot.slane %v1087, 7
  %v1090 = vshll.u32 %v986, 16
  %v1092 = vor.u32 %v1089, %v1090
  %v1093 = vrot.slane %v1089, 4
  %v1095 = vshrl.u32 %v987, 16
  %v1097 = vrot.slane %v1095, 7
  %v1098 = vshll.u32 %v987, 16
  %v1100 = vor.u32 %v1097, %v1098
  %v1101 = vrot.slane %v1097, 4
  %v1103 = vshrl.u32 %v988, 16
  %v1105 = vrot.slane %v1103, 7
  %v1106 = vshll.u32 %v988, 16
  %v1108 = vor.u32 %v1105, %v1106
  %v1109 = vrot.slane %v1105, 4
  %v1111 = vshrl.u32 %v989, 16
  %v1113 = vrot.slane %v1111, 7
  %v1114 = vshll.u32 %v989, 16
  %v1116 = vor.u32 %v1113, %v1114
  %v1117 = vrot.slane %v1113, 4
  %vm1150 = vcmask 1043456
  %vm1151 = vmand %vm1150, %vm876
  %v1152 = vld [vmem:[%s824] sm:$0xf]
  %v1153 = vsel %vm1151, %v996, %v1152
  %1154 = vst [vmem:[%s824] sm:$0xf] %v1153
  %v1155 = vld [vmem:[%s824 + $0x4] sm:$0x1]
  %v1156 = vsel %vm827, %v997, %v1155
  %1157 = vst [vmem:[%s824 + $0x4] sm:$0x1] %v1156
  %v1158 = vld [vmem:[%s824 + $0x8] sm:$0xf]
  %v1159 = vsel %vm1151, %v1004, %v1158
  %1160 = vst [vmem:[%s824 + $0x8] sm:$0xf] %v1159
  %v1161 = vld [vmem:[%s824 + $0xc] sm:$0x1]
  %v1162 = vsel %vm827, %v1005, %v1161
  %1163 = vst [vmem:[%s824 + $0xc] sm:$0x1] %v1162
  %v1164 = vld [vmem:[%s824 + $0x10] sm:$0xf]
  %v1165 = vsel %vm1151, %v1012, %v1164
  %1166 = vst [vmem:[%s824 + $0x10] sm:$0xf] %v1165
  %v1167 = vld [vmem:[%s824 + $0x14] sm:$0x1]
  %v1168 = vsel %vm827, %v1013, %v1167
  %1169 = vst [vmem:[%s824 + $0x14] sm:$0x1] %v1168
  %v1170 = vld [vmem:[%s824 + $0x18] sm:$0xf]
  %v1171 = vsel %vm1151, %v1020, %v1170
  %1172 = vst [vmem:[%s824 + $0x18] sm:$0xf] %v1171
  %v1173 = vld [vmem:[%s824 + $0x1c] sm:$0x1]
  %v1174 = vsel %vm827, %v1021, %v1173
  %1175 = vst [vmem:[%s824 + $0x1c] sm:$0x1] %v1174
  %v1176 = vld [vmem:[%s824 + $0x20] sm:$0xf]
  %v1177 = vsel %vm1151, %v1028, %v1176
  %1178 = vst [vmem:[%s824 + $0x20] sm:$0xf] %v1177
  %v1179 = vld [vmem:[%s824 + $0x24] sm:$0x1]
  %v1180 = vsel %vm827, %v1029, %v1179
  %1181 = vst [vmem:[%s824 + $0x24] sm:$0x1] %v1180
  %v1182 = vld [vmem:[%s824 + $0x28] sm:$0xf]
  %v1183 = vsel %vm1151, %v1036, %v1182
  %1184 = vst [vmem:[%s824 + $0x28] sm:$0xf] %v1183
  %v1185 = vld [vmem:[%s824 + $0x2c] sm:$0x1]
  %v1186 = vsel %vm827, %v1037, %v1185
  %1187 = vst [vmem:[%s824 + $0x2c] sm:$0x1] %v1186
  %v1188 = vld [vmem:[%s824 + $0x30] sm:$0xf]
  %v1189 = vsel %vm1151, %v1044, %v1188
  %1190 = vst [vmem:[%s824 + $0x30] sm:$0xf] %v1189
  %v1191 = vld [vmem:[%s824 + $0x34] sm:$0x1]
  %v1192 = vsel %vm827, %v1045, %v1191
  %1193 = vst [vmem:[%s824 + $0x34] sm:$0x1] %v1192
  %v1194 = vld [vmem:[%s824 + $0x38] sm:$0xf]
  %v1195 = vsel %vm1151, %v1052, %v1194
  %1196 = vst [vmem:[%s824 + $0x38] sm:$0xf] %v1195
  %v1197 = vld [vmem:[%s824 + $0x3c] sm:$0x1]
  %v1198 = vsel %vm827, %v1053, %v1197
  %1199 = vst [vmem:[%s824 + $0x3c] sm:$0x1] %v1198
  %v1200 = vld [vmem:[%s824 + $0x50] sm:$0xf]
  %v1201 = vsel %vm1151, %v1060, %v1200
  %1202 = vst [vmem:[%s824 + $0x50] sm:$0xf] %v1201
  %v1203 = vld [vmem:[%s824 + $0x54] sm:$0x1]
  %v1204 = vsel %vm827, %v1061, %v1203
  %1205 = vst [vmem:[%s824 + $0x54] sm:$0x1] %v1204
  %v1206 = vld [vmem:[%s824 + $0x58] sm:$0xf]
  %v1207 = vsel %vm1151, %v1068, %v1206
  %1208 = vst [vmem:[%s824 + $0x58] sm:$0xf] %v1207
  %v1209 = vld [vmem:[%s824 + $0x5c] sm:$0x1]
  %v1210 = vsel %vm827, %v1069, %v1209
  %1211 = vst [vmem:[%s824 + $0x5c] sm:$0x1] %v1210
  %v1212 = vld [vmem:[%s824 + $0x60] sm:$0xf]
  %v1213 = vsel %vm1151, %v1076, %v1212
  %1214 = vst [vmem:[%s824 + $0x60] sm:$0xf] %v1213
  %v1215 = vld [vmem:[%s824 + $0x64] sm:$0x1]
  %v1216 = vsel %vm827, %v1077, %v1215
  %1217 = vst [vmem:[%s824 + $0x64] sm:$0x1] %v1216
  %v1218 = vld [vmem:[%s824 + $0x68] sm:$0xf]
  %v1219 = vsel %vm1151, %v1084, %v1218
  %1220 = vst [vmem:[%s824 + $0x68] sm:$0xf] %v1219
  %v1221 = vld [vmem:[%s824 + $0x6c] sm:$0x1]
  %v1222 = vsel %vm827, %v1085, %v1221
  %1223 = vst [vmem:[%s824 + $0x6c] sm:$0x1] %v1222
  %v1224 = vld [vmem:[%s824 + $0x70] sm:$0xf]
  %v1225 = vsel %vm1151, %v1092, %v1224
  %1226 = vst [vmem:[%s824 + $0x70] sm:$0xf] %v1225
  %v1227 = vld [vmem:[%s824 + $0x74] sm:$0x1]
  %v1228 = vsel %vm827, %v1093, %v1227
  %1229 = vst [vmem:[%s824 + $0x74] sm:$0x1] %v1228
  %v1230 = vld [vmem:[%s824 + $0x78] sm:$0xf]
  %v1231 = vsel %vm1151, %v1100, %v1230
  %1232 = vst [vmem:[%s824 + $0x78] sm:$0xf] %v1231
  %v1233 = vld [vmem:[%s824 + $0x7c] sm:$0x1]
  %v1234 = vsel %vm827, %v1101, %v1233
  %1235 = vst [vmem:[%s824 + $0x7c] sm:$0x1] %v1234
  %v1236 = vld [vmem:[%s824 + $0x80] sm:$0xf]
  %v1237 = vsel %vm1151, %v1108, %v1236
  %1238 = vst [vmem:[%s824 + $0x80] sm:$0xf] %v1237
  %v1239 = vld [vmem:[%s824 + $0x84] sm:$0x1]
  %v1240 = vsel %vm827, %v1109, %v1239
  %1241 = vst [vmem:[%s824 + $0x84] sm:$0x1] %v1240
  %v1242 = vld [vmem:[%s824 + $0x88] sm:$0xf]
  %v1243 = vsel %vm1151, %v1116, %v1242
  %1244 = vst [vmem:[%s824 + $0x88] sm:$0xf] %v1243
  %v1245 = vld [vmem:[%s824 + $0x8c] sm:$0x1]
  %v1246 = vsel %vm827, %v1117, %v1245
  %1247 = vst [vmem:[%s824 + $0x8c] sm:$0x1] %v1246
  %v1248 = vld [vmem:[#allocation2] sm:$0xf]
  %v1249 = vld [vmem:[#allocation2 + $0x4] sm:$0x1]
  %v1250 = vld [vmem:[#allocation2 + $0x8] sm:$0xf]
  %v1251 = vld [vmem:[#allocation2 + $0xc] sm:$0x1]
  %v1252 = vld [vmem:[#allocation2 + $0x10] sm:$0xf]
  %v1253 = vld [vmem:[#allocation2 + $0x14] sm:$0x1]
  %v1254 = vld [vmem:[#allocation2 + $0x18] sm:$0xf]
  %v1255 = vld [vmem:[#allocation2 + $0x1c] sm:$0x1]
  %v1256 = vld [vmem:[#allocation2 + $0x20] sm:$0xf]
  %v1257 = vld [vmem:[#allocation2 + $0x24] sm:$0x1]
  %v1258 = vld [vmem:[#allocation2 + $0x28] sm:$0xf]
  %v1259 = vld [vmem:[#allocation2 + $0x2c] sm:$0x1]
  %v1260 = vld [vmem:[#allocation2 + $0x30] sm:$0xf]
  %v1261 = vld [vmem:[#allocation2 + $0x34] sm:$0x1]
  %v1262 = vld [vmem:[#allocation2 + $0x38] sm:$0xf]
  %v1263 = vld [vmem:[#allocation2 + $0x3c] sm:$0x1]
  %v1264 = vld [vmem:[#allocation2 + $0x40] sm:$0xf]
  %v1265 = vld [vmem:[#allocation2 + $0x44] sm:$0x1]
  %v1266 = vld [vmem:[#allocation2 + $0x48] sm:$0xf]
  %v1267 = vld [vmem:[#allocation2 + $0x4c] sm:$0x1]
  %v1268 = vld [vmem:[#allocation2 + $0x50] sm:$0xf]
  %v1269 = vld [vmem:[#allocation2 + $0x54] sm:$0x1]
  %v1270 = vld [vmem:[#allocation2 + $0x58] sm:$0xf]
  %v1271 = vld [vmem:[#allocation2 + $0x5c] sm:$0x1]
  %v1272 = vld [vmem:[#allocation2 + $0x60] sm:$0xf]
  %v1273 = vld [vmem:[#allocation2 + $0x64] sm:$0x1]
  %v1274 = vld [vmem:[#allocation2 + $0x68] sm:$0xf]
  %v1275 = vld [vmem:[#allocation2 + $0x6c] sm:$0x1]
  %v1276 = vld [vmem:[#allocation2 + $0x70] sm:$0xf]
  %v1277 = vld [vmem:[#allocation2 + $0x74] sm:$0x1]
  %v1278 = vld [vmem:[#allocation2 + $0x78] sm:$0xf]
  %v1279 = vld [vmem:[#allocation2 + $0x7c] sm:$0x1]
  %v1280 = vld [vmem:[#allocation2 + $0x80] sm:$0xf]
  %v1281 = vld [vmem:[#allocation2 + $0x84] sm:$0x1]
  %v1282 = vld [vmem:[#allocation2 + $0x88] sm:$0xf]
  %v1283 = vld [vmem:[#allocation2 + $0x8c] sm:$0x1]
  %v1284 = vld [vmem:[#allocation2 + $0x90] sm:$0xf]
  %v1285 = vld [vmem:[#allocation2 + $0x94] sm:$0x1]
  %v1286 = vld [vmem:[#allocation2 + $0x98] sm:$0xf]
  %v1287 = vld [vmem:[#allocation2 + $0x9c] sm:$0x1]
  %v1320 = vunpack.c.l.b16 %v1248
  %v1321 = vunpack.c.l.b16 %v1249
  %v1322 = vunpack.c.l.b16 %v1250
  %v1323 = vunpack.c.l.b16 %v1251
  %v1324 = vunpack.c.l.b16 %v1252
  %v1325 = vunpack.c.l.b16 %v1253
  %v1326 = vunpack.c.l.b16 %v1254
  %v1327 = vunpack.c.l.b16 %v1255
  %v1328 = vunpack.c.l.b16 %v1256
  %v1329 = vunpack.c.l.b16 %v1257
  %v1330 = vunpack.c.l.b16 %v1258
  %v1331 = vunpack.c.l.b16 %v1259
  %v1332 = vunpack.c.l.b16 %v1260
  %v1333 = vunpack.c.l.b16 %v1261
  %v1334 = vunpack.c.l.b16 %v1262
  %v1335 = vunpack.c.l.b16 %v1263
  %v1336 = vunpack.c.l.b16 %v1268
  %v1337 = vunpack.c.l.b16 %v1269
  %v1338 = vunpack.c.l.b16 %v1270
  %v1339 = vunpack.c.l.b16 %v1271
  %v1340 = vunpack.c.l.b16 %v1272
  %v1341 = vunpack.c.l.b16 %v1273
  %v1342 = vunpack.c.l.b16 %v1274
  %v1343 = vunpack.c.l.b16 %v1275
  %v1344 = vunpack.c.l.b16 %v1276
  %v1345 = vunpack.c.l.b16 %v1277
  %v1346 = vunpack.c.l.b16 %v1278
  %v1347 = vunpack.c.l.b16 %v1279
  %v1348 = vunpack.c.l.b16 %v1280
  %v1349 = vunpack.c.l.b16 %v1281
  %v1350 = vunpack.c.l.b16 %v1282
  %v1351 = vunpack.c.l.b16 %v1283
  %v1352 = vpack.c.b16 %v1321, %v1320
  %v1353 = vpack.c.b16 %v1323, %v1322
  %v1354 = vpack.c.b16 %v1325, %v1324
  %v1355 = vpack.c.b16 %v1327, %v1326
  %v1356 = vpack.c.b16 %v1329, %v1328
  %v1357 = vpack.c.b16 %v1331, %v1330
  %v1358 = vpack.c.b16 %v1333, %v1332
  %v1359 = vpack.c.b16 %v1335, %v1334
  %v1360 = vpack.c.b16 %v1337, %v1336
  %v1361 = vpack.c.b16 %v1339, %v1338
  %v1362 = vpack.c.b16 %v1341, %v1340
  %v1363 = vpack.c.b16 %v1343, %v1342
  %v1364 = vpack.c.b16 %v1345, %v1344
  %v1365 = vpack.c.b16 %v1347, %v1346
  %v1366 = vpack.c.b16 %v1349, %v1348
  %v1367 = vpack.c.b16 %v1351, %v1350
  %v1369 = vshrl.u32 %v1352, 16
  %v1371 = vshll.u32 %v1352, 16
  %v1373 = vrot.slane %v1371, 1
  %v1374 = vor.u32 %v1369, %v1373
  %v1376 = vshrl.u32 %v1353, 16
  %v1378 = vshll.u32 %v1353, 16
  %v1380 = vrot.slane %v1378, 1
  %v1381 = vor.u32 %v1376, %v1380
  %v1383 = vshrl.u32 %v1354, 16
  %v1385 = vshll.u32 %v1354, 16
  %v1387 = vrot.slane %v1385, 1
  %v1388 = vor.u32 %v1383, %v1387
  %v1390 = vshrl.u32 %v1355, 16
  %v1392 = vshll.u32 %v1355, 16
  %v1394 = vrot.slane %v1392, 1
  %v1395 = vor.u32 %v1390, %v1394
  %v1397 = vshrl.u32 %v1356, 16
  %v1399 = vshll.u32 %v1356, 16
  %v1401 = vrot.slane %v1399, 1
  %v1402 = vor.u32 %v1397, %v1401
  %v1404 = vshrl.u32 %v1357, 16
  %v1406 = vshll.u32 %v1357, 16
  %v1408 = vrot.slane %v1406, 1
  %v1409 = vor.u32 %v1404, %v1408
  %v1411 = vshrl.u32 %v1358, 16
  %v1413 = vshll.u32 %v1358, 16
  %v1415 = vrot.slane %v1413, 1
  %v1416 = vor.u32 %v1411, %v1415
  %v1418 = vshrl.u32 %v1359, 16
  %v1420 = vshll.u32 %v1359, 16
  %v1422 = vrot.slane %v1420, 1
  %v1423 = vor.u32 %v1418, %v1422
  %v1425 = vshrl.u32 %v1360, 16
  %v1427 = vshll.u32 %v1360, 16
  %v1429 = vrot.slane %v1427, 1
  %v1430 = vor.u32 %v1425, %v1429
  %v1432 = vshrl.u32 %v1361, 16
  %v1434 = vshll.u32 %v1361, 16
  %v1436 = vrot.slane %v1434, 1
  %v1437 = vor.u32 %v1432, %v1436
  %v1439 = vshrl.u32 %v1362, 16
  %v1441 = vshll.u32 %v1362, 16
  %v1443 = vrot.slane %v1441, 1
  %v1444 = vor.u32 %v1439, %v1443
  %v1446 = vshrl.u32 %v1363, 16
  %v1448 = vshll.u32 %v1363, 16
  %v1450 = vrot.slane %v1448, 1
  %v1451 = vor.u32 %v1446, %v1450
  %v1453 = vshrl.u32 %v1364, 16
  %v1455 = vshll.u32 %v1364, 16
  %v1457 = vrot.slane %v1455, 1
  %v1458 = vor.u32 %v1453, %v1457
  %v1460 = vshrl.u32 %v1365, 16
  %v1462 = vshll.u32 %v1365, 16
  %v1464 = vrot.slane %v1462, 1
  %v1465 = vor.u32 %v1460, %v1464
  %v1467 = vshrl.u32 %v1366, 16
  %v1469 = vshll.u32 %v1366, 16
  %v1471 = vrot.slane %v1469, 1
  %v1472 = vor.u32 %v1467, %v1471
  %v1474 = vshrl.u32 %v1367, 16
  %v1476 = vshll.u32 %v1367, 16
  %v1478 = vrot.slane %v1476, 1
  %v1479 = vor.u32 %v1474, %v1478
  %v1480 = vrot.slane %v1352, 1
  %v1481 = vrot.slane %v1353, 1
  %v1482 = vrot.slane %v1354, 1
  %v1483 = vrot.slane %v1355, 1
  %v1484 = vrot.slane %v1356, 1
  %v1485 = vrot.slane %v1357, 1
  %v1486 = vrot.slane %v1358, 1
  %v1487 = vrot.slane %v1359, 1
  %v1488 = vrot.slane %v1360, 1
  %v1489 = vrot.slane %v1361, 1
  %v1490 = vrot.slane %v1362, 1
  %v1491 = vrot.slane %v1363, 1
  %v1492 = vrot.slane %v1364, 1
  %v1493 = vrot.slane %v1365, 1
  %v1494 = vrot.slane %v1366, 1
  %v1495 = vrot.slane %v1367, 1
  %v1500 = vunpack.c.l.b16 %v1264
  %v1501 = vunpack.c.l.b16 %v1265
  %v1502 = vunpack.c.l.b16 %v1284
  %v1503 = vunpack.c.l.b16 %v1285
  %v1504 = vpack.c.b16 %v1501, %v1500
  %v1505 = vpack.c.b16 %v1503, %v1502
  %v1507 = vshrl.u32 %v1504, 16
  %v1509 = vshll.u32 %v1504, 16
  %v1511 = vrot.slane %v1509, 1
  %v1512 = vor.u32 %v1507, %v1511
  %v1514 = vshrl.u32 %v1505, 16
  %v1516 = vshll.u32 %v1505, 16
  %v1518 = vrot.slane %v1516, 1
  %v1519 = vor.u32 %v1514, %v1518
  %v1520 = vrot.slane %v1504, 1
  %v1521 = vrot.slane %v1505, 1
  %v1526 = vunpack.c.l.b16 %v1266
  %v1527 = vunpack.c.l.b16 %v1267
  %v1528 = vunpack.c.l.b16 %v1286
  %v1529 = vunpack.c.l.b16 %v1287
  %v1530 = vpack.c.b16 %v1527, %v1526
  %v1531 = vpack.c.b16 %v1529, %v1528
  %v1533 = vshrl.u32 %v1530, 16
  %v1535 = vshll.u32 %v1530, 16
  %v1537 = vrot.slane %v1535, 1
  %v1538 = vor.u32 %v1533, %v1537
  %v1540 = vshrl.u32 %v1531, 16
  %v1542 = vshll.u32 %v1531, 16
  %v1544 = vrot.slane %v1542, 1
  %v1545 = vor.u32 %v1540, %v1544
  %v1546 = vrot.slane %v1530, 1
  %v1547 = vrot.slane %v1531, 1
  %v1548 = vunpack.c.l.b16 %v1374
  %v1549 = vunpack.c.l.b16 %v1480
  %v1550 = vunpack.c.l.b16 %v1381
  %v1551 = vunpack.c.l.b16 %v1481
  %v1552 = vunpack.c.l.b16 %v1388
  %v1553 = vunpack.c.l.b16 %v1482
  %v1554 = vunpack.c.l.b16 %v1395
  %v1555 = vunpack.c.l.b16 %v1483
  %v1556 = vunpack.c.l.b16 %v1402
  %v1557 = vunpack.c.l.b16 %v1484
  %v1558 = vunpack.c.l.b16 %v1409
  %v1559 = vunpack.c.l.b16 %v1485
  %v1560 = vunpack.c.l.b16 %v1416
  %v1561 = vunpack.c.l.b16 %v1486
  %v1562 = vunpack.c.l.b16 %v1423
  %v1563 = vunpack.c.l.b16 %v1487
  %v1564 = vunpack.c.l.b16 %v1512
  %v1565 = vunpack.c.l.b16 %v1520
  %v1566 = vunpack.c.l.b16 %v1538
  %v1567 = vunpack.c.l.b16 %v1546
  %v1568 = vunpack.c.l.b16 %v1430
  %v1569 = vunpack.c.l.b16 %v1488
  %v1570 = vunpack.c.l.b16 %v1437
  %v1571 = vunpack.c.l.b16 %v1489
  %v1572 = vunpack.c.l.b16 %v1444
  %v1573 = vunpack.c.l.b16 %v1490
  %v1574 = vunpack.c.l.b16 %v1451
  %v1575 = vunpack.c.l.b16 %v1491
  %v1576 = vunpack.c.l.b16 %v1458
  %v1577 = vunpack.c.l.b16 %v1492
  %v1578 = vunpack.c.l.b16 %v1465
  %v1579 = vunpack.c.l.b16 %v1493
  %v1580 = vunpack.c.l.b16 %v1472
  %v1581 = vunpack.c.l.b16 %v1494
  %v1582 = vunpack.c.l.b16 %v1479
  %v1583 = vunpack.c.l.b16 %v1495
  %v1584 = vunpack.c.l.b16 %v1519
  %v1585 = vunpack.c.l.b16 %v1521
  %v1586 = vunpack.c.l.b16 %v1545
  %v1587 = vunpack.c.l.b16 %v1547
  %v1588 = vld [vmem:[%s3] sm:$0xf]
  %v1589 = vld [vmem:[%s3 + $0x4] sm:$0xf]
  %v1590 = vld [vmem:[%s3 + $0x8] sm:$0xf]
  %v1591 = vld [vmem:[%s3 + $0xc] sm:$0xf]
  %v1592 = vld [vmem:[%s3 + $0x10] sm:$0xf]
  %v1593 = vld [vmem:[%s3 + $0x14] sm:$0xf]
  %v1594 = vld [vmem:[%s3 + $0x18] sm:$0xf]
  %v1595 = vld [vmem:[%s3 + $0x1c] sm:$0xf]
  %v1596 = vld [vmem:[%s3 + $0x20] sm:$0xf]
  %v1597 = vld [vmem:[%s3 + $0x24] sm:$0xf]
  %v1598 = vld [vmem:[%s3 + $0x28] sm:$0xf]
  %v1599 = vld [vmem:[%s3 + $0x2c] sm:$0xf]
  %v1600 = vld [vmem:[%s3 + $0x30] sm:$0xf]
  %v1601 = vld [vmem:[%s3 + $0x34] sm:$0xf]
  %v1602 = vld [vmem:[%s3 + $0x38] sm:$0xf]
  %v1603 = vld [vmem:[%s3 + $0x3c] sm:$0xf]
  %v1604 = vld [vmem:[%s3 + $0x40] sm:$0xf]
  %v1605 = vld [vmem:[%s3 + $0x44] sm:$0xf]
  %v1606 = vld [vmem:[%s3 + $0x48] sm:$0xf]
  %v1607 = vld [vmem:[%s3 + $0x4c] sm:$0xf]
  %v1608 = vld [vmem:[%s3 + $0x50] sm:$0xf]
  %v1609 = vld [vmem:[%s3 + $0x54] sm:$0xf]
  %v1610 = vld [vmem:[%s3 + $0x58] sm:$0xf]
  %v1611 = vld [vmem:[%s3 + $0x5c] sm:$0xf]
  %v1612 = vld [vmem:[%s3 + $0x60] sm:$0xf]
  %v1613 = vld [vmem:[%s3 + $0x64] sm:$0xf]
  %v1614 = vld [vmem:[%s3 + $0x68] sm:$0xf]
  %v1615 = vld [vmem:[%s3 + $0x6c] sm:$0xf]
  %v1616 = vld [vmem:[%s3 + $0x70] sm:$0xf]
  %v1617 = vld [vmem:[%s3 + $0x74] sm:$0xf]
  %v1618 = vld [vmem:[%s3 + $0x78] sm:$0xf]
  %v1619 = vld [vmem:[%s3 + $0x7c] sm:$0xf]
  %v1620 = vld [vmem:[%s3 + $0x80] sm:$0xf]
  %v1621 = vld [vmem:[%s3 + $0x84] sm:$0xf]
  %v1622 = vld [vmem:[%s3 + $0x88] sm:$0xf]
  %v1623 = vld [vmem:[%s3 + $0x8c] sm:$0xf]
  %v1624 = vld [vmem:[%s3 + $0x90] sm:$0xf]
  %v1625 = vld [vmem:[%s3 + $0x94] sm:$0xf]
  %v1626 = vld [vmem:[%s3 + $0x98] sm:$0xf]
  %v1627 = vld [vmem:[%s3 + $0x9c] sm:$0xf]
  %v1628 = vld [vmem:[%s3 + $0xa0] sm:$0xf]
  %v1629 = vld [vmem:[%s3 + $0xa4] sm:$0xf]
  %v1630 = vld [vmem:[%s3 + $0xa8] sm:$0xf]
  %v1631 = vld [vmem:[%s3 + $0xac] sm:$0xf]
  %v1632 = vld [vmem:[%s3 + $0xb0] sm:$0xf]
  %v1633 = vld [vmem:[%s3 + $0xb4] sm:$0xf]
  %v1634 = vld [vmem:[%s3 + $0xb8] sm:$0xf]
  %v1635 = vld [vmem:[%s3 + $0xbc] sm:$0xf]
  %v1636 = vld [vmem:[%s3 + $0xc0] sm:$0xf]
  %v1637 = vld [vmem:[%s3 + $0xc4] sm:$0xf]
  %v1638 = vld [vmem:[%s3 + $0xc8] sm:$0xf]
  %v1639 = vld [vmem:[%s3 + $0xcc] sm:$0xf]
  %v1640 = vld [vmem:[%s3 + $0xd0] sm:$0xf]
  %v1641 = vld [vmem:[%s3 + $0xd4] sm:$0xf]
  %v1642 = vld [vmem:[%s3 + $0xd8] sm:$0xf]
  %v1643 = vld [vmem:[%s3 + $0xdc] sm:$0xf]
  %v1644 = vld [vmem:[%s3 + $0xe0] sm:$0xf]
  %v1645 = vld [vmem:[%s3 + $0xe4] sm:$0xf]
  %v1646 = vld [vmem:[%s3 + $0xe8] sm:$0xf]
  %v1647 = vld [vmem:[%s3 + $0xec] sm:$0xf]
  %v1648 = vld [vmem:[%s3 + $0xf0] sm:$0xf]
  %v1649 = vld [vmem:[%s3 + $0xf4] sm:$0xf]
  %v1650 = vld [vmem:[%s3 + $0xf8] sm:$0xf]
  %v1651 = vld [vmem:[%s3 + $0xfc] sm:$0xf]
  %v1652 = vld [vmem:[%s3 + $0x100] sm:$0xf]
  %v1653 = vld [vmem:[%s3 + $0x104] sm:$0xf]
  %v1654 = vld [vmem:[%s3 + $0x108] sm:$0xf]
  %v1655 = vld [vmem:[%s3 + $0x10c] sm:$0xf]
  %v1656 = vld [vmem:[%s3 + $0x110] sm:$0xf]
  %v1657 = vld [vmem:[%s3 + $0x114] sm:$0xf]
  %v1658 = vld [vmem:[%s3 + $0x118] sm:$0xf]
  %v1659 = vld [vmem:[%s3 + $0x11c] sm:$0xf]
  %v1660 = vld [vmem:[%s3 + $0x120] sm:$0xf]
  %v1661 = vld [vmem:[%s3 + $0x124] sm:$0xf]
  %v1662 = vld [vmem:[%s3 + $0x128] sm:$0xf]
  %v1663 = vld [vmem:[%s3 + $0x12c] sm:$0xf]
  %v1664 = vld [vmem:[%s3 + $0x130] sm:$0xf]
  %v1665 = vld [vmem:[%s3 + $0x134] sm:$0xf]
  %v1666 = vld [vmem:[%s3 + $0x138] sm:$0xf]
  %v1667 = vld [vmem:[%s3 + $0x13c] sm:$0xf]
  %v1668 = vld [vmem:[%s3 + $0x140] sm:$0xf]
  %v1669 = vld [vmem:[%s3 + $0x144] sm:$0xf]
  %v1670 = vld [vmem:[%s3 + $0x148] sm:$0xf]
  %v1671 = vld [vmem:[%s3 + $0x14c] sm:$0xf]
  %v1672 = vld [vmem:[%s3 + $0x150] sm:$0xf]
  %v1673 = vld [vmem:[%s3 + $0x154] sm:$0xf]
  %v1674 = vld [vmem:[%s3 + $0x158] sm:$0xf]
  %v1675 = vld [vmem:[%s3 + $0x15c] sm:$0xf]
  %v1676 = vld [vmem:[%s3 + $0x160] sm:$0xf]
  %v1677 = vld [vmem:[%s3 + $0x164] sm:$0xf]
  %v1678 = vld [vmem:[%s3 + $0x168] sm:$0xf]
  %v1679 = vld [vmem:[%s3 + $0x16c] sm:$0xf]
  %v1680 = vld [vmem:[%s3 + $0x170] sm:$0xf]
  %v1681 = vld [vmem:[%s3 + $0x174] sm:$0xf]
  %v1682 = vld [vmem:[%s3 + $0x178] sm:$0xf]
  %v1683 = vld [vmem:[%s3 + $0x17c] sm:$0xf]
  %v1684 = vld [vmem:[%s3 + $0x180] sm:$0xf]
  %v1685 = vld [vmem:[%s3 + $0x184] sm:$0xf]
  %v1686 = vld [vmem:[%s3 + $0x188] sm:$0xf]
  %v1687 = vld [vmem:[%s3 + $0x18c] sm:$0xf]
  %v1688 = vld [vmem:[%s3 + $0x190] sm:$0xf]
  %v1689 = vld [vmem:[%s3 + $0x194] sm:$0xf]
  %v1690 = vld [vmem:[%s3 + $0x198] sm:$0xf]
  %v1691 = vld [vmem:[%s3 + $0x19c] sm:$0xf]
  %v1692 = vld [vmem:[%s3 + $0x1a0] sm:$0xf]
  %v1693 = vld [vmem:[%s3 + $0x1a4] sm:$0xf]
  %v1694 = vld [vmem:[%s3 + $0x1a8] sm:$0xf]
  %v1695 = vld [vmem:[%s3 + $0x1ac] sm:$0xf]
  %v1696 = vld [vmem:[%s3 + $0x1b0] sm:$0xf]
  %v1697 = vld [vmem:[%s3 + $0x1b4] sm:$0xf]
  %v1698 = vld [vmem:[%s3 + $0x1b8] sm:$0xf]
  %v1699 = vld [vmem:[%s3 + $0x1bc] sm:$0xf]
  %v1700 = vld [vmem:[%s3 + $0x1c0] sm:$0xf]
  %v1701 = vld [vmem:[%s3 + $0x1c4] sm:$0xf]
  %v1702 = vld [vmem:[%s3 + $0x1c8] sm:$0xf]
  %v1703 = vld [vmem:[%s3 + $0x1cc] sm:$0xf]
  %v1704 = vld [vmem:[%s3 + $0x1d0] sm:$0xf]
  %v1705 = vld [vmem:[%s3 + $0x1d4] sm:$0xf]
  %v1706 = vld [vmem:[%s3 + $0x1d8] sm:$0xf]
  %v1707 = vld [vmem:[%s3 + $0x1dc] sm:$0xf]
  %v1708 = vld [vmem:[%s3 + $0x1e0] sm:$0xf]
  %v1709 = vld [vmem:[%s3 + $0x1e4] sm:$0xf]
  %v1710 = vld [vmem:[%s3 + $0x1e8] sm:$0xf]
  %v1711 = vld [vmem:[%s3 + $0x1ec] sm:$0xf]
  %v1712 = vld [vmem:[%s3 + $0x1f0] sm:$0xf]
  %v1713 = vld [vmem:[%s3 + $0x1f4] sm:$0xf]
  %v1714 = vld [vmem:[%s3 + $0x1f8] sm:$0xf]
  %v1715 = vld [vmem:[%s3 + $0x1fc] sm:$0xf]
  %v1716 = vld [vmem:[%s3 + $0x200] sm:$0xf]
  %v1717 = vld [vmem:[%s3 + $0x204] sm:$0xf]
  %v1718 = vld [vmem:[%s3 + $0x208] sm:$0xf]
  %v1719 = vld [vmem:[%s3 + $0x20c] sm:$0xf]
  %v1720 = vld [vmem:[%s3 + $0x210] sm:$0xf]
  %v1721 = vld [vmem:[%s3 + $0x214] sm:$0xf]
  %v1722 = vld [vmem:[%s3 + $0x218] sm:$0xf]
  %v1723 = vld [vmem:[%s3 + $0x21c] sm:$0xf]
  %v1724 = vld [vmem:[%s3 + $0x220] sm:$0xf]
  %v1725 = vld [vmem:[%s3 + $0x224] sm:$0xf]
  %v1726 = vld [vmem:[%s3 + $0x228] sm:$0xf]
  %v1727 = vld [vmem:[%s3 + $0x22c] sm:$0xf]
  %v1728 = vld [vmem:[%s3 + $0x230] sm:$0xf]
  %v1729 = vld [vmem:[%s3 + $0x234] sm:$0xf]
  %v1730 = vld [vmem:[%s3 + $0x238] sm:$0xf]
  %v1731 = vld [vmem:[%s3 + $0x23c] sm:$0xf]
  %vm1764 = vcmask 1046528
  %v1765 = vrot.slane %v26, 1
  %v1766 = vrot.slane %v27, 1
  %v1767 = vsel %vm1764, %v1765, %v1766
  %v1768 = vrot.slane %v28, 1
  %v1769 = vrot.slane %v29, 1
  %v1770 = vsel %vm1764, %v1768, %v1769
  %v1771 = vrot.slane %v30, 1
  %v1772 = vrot.slane %v31, 1
  %v1773 = vsel %vm1764, %v1771, %v1772
  %v1774 = vrot.slane %v32, 1
  %v1775 = vrot.slane %v33, 1
  %v1776 = vsel %vm1764, %v1774, %v1775
  %v1777 = vrot.slane %v34, 1
  %v1778 = vrot.slane %v35, 1
  %v1779 = vsel %vm1764, %v1777, %v1778
  %v1780 = vrot.slane %v36, 1
  %v1781 = vrot.slane %v37, 1
  %v1782 = vsel %vm1764, %v1780, %v1781
  %v1783 = vrot.slane %v38, 1
  %v1784 = vrot.slane %v39, 1
  %v1785 = vsel %vm1764, %v1783, %v1784
  %v1786 = vrot.slane %v40, 1
  %v1787 = vrot.slane %v41, 1
  %v1788 = vsel %vm1764, %v1786, %v1787
  %v1789 = vrot.slane %v44, 1
  %v1790 = vrot.slane %v45, 1
  %v1791 = vsel %vm1764, %v1789, %v1790
  %v1792 = vrot.slane %v46, 1
  %v1793 = vrot.slane %v47, 1
  %v1794 = vsel %vm1764, %v1792, %v1793
  %v1795 = vrot.slane %v48, 1
  %v1796 = vrot.slane %v49, 1
  %v1797 = vsel %vm1764, %v1795, %v1796
  %v1798 = vrot.slane %v50, 1
  %v1799 = vrot.slane %v51, 1
  %v1800 = vsel %vm1764, %v1798, %v1799
  %v1801 = vrot.slane %v52, 1
  %v1802 = vrot.slane %v53, 1
  %v1803 = vsel %vm1764, %v1801, %v1802
  %v1804 = vrot.slane %v54, 1
  %v1805 = vrot.slane %v55, 1
  %v1806 = vsel %vm1764, %v1804, %v1805
  %v1807 = vrot.slane %v56, 1
  %v1808 = vrot.slane %v57, 1
  %v1809 = vsel %vm1764, %v1807, %v1808
  %v1810 = vrot.slane %v58, 1
  %v1811 = vrot.slane %v59, 1
  %v1812 = vsel %vm1764, %v1810, %v1811
  %v1829 = vld [vmem:[%s4] sm:$0xff]
  %v1830 = vld [vmem:[%s4 + $0x8] sm:$0xff]
  %v1831 = vld [vmem:[%s4 + $0x10] sm:$0xff]
  %v1832 = vld [vmem:[%s4 + $0x18] sm:$0xff]
  %v1833 = vld [vmem:[%s4 + $0x20] sm:$0xff]
  %v1834 = vld [vmem:[%s4 + $0x28] sm:$0xff]
  %v1835 = vld [vmem:[%s4 + $0x30] sm:$0xff]
  %v1836 = vld [vmem:[%s4 + $0x38] sm:$0xff]
  %v1837 = vld [vmem:[%s4 + $0x40] sm:$0xff]
  %v1838 = vld [vmem:[%s4 + $0x48] sm:$0xff]
  %v1839 = vld [vmem:[%s4 + $0x50] sm:$0xff]
  %v1840 = vld [vmem:[%s4 + $0x58] sm:$0xff]
  %v1841 = vld [vmem:[%s4 + $0x60] sm:$0xff]
  %v1842 = vld [vmem:[%s4 + $0x68] sm:$0xff]
  %v1843 = vld [vmem:[%s4 + $0x70] sm:$0xff]
  %v1844 = vld [vmem:[%s4 + $0x78] sm:$0xff]
  %v1845 = vld [vmem:[%s5] sm:$0x1]
  %v1847 = vlaneseq
  %v1848 = vshrl.u32 %v1847, 7
  %v1849 = vsub.s32 0, %v1848
  %v1850 = vrot.slane %v1845, %v1849
  %1852 = vmatprep.subr.mxu0 0.0
  %1853 = vmatpush1.msra.mxu0 %v1829
  %1854 = vmatprep.subr.mxu0 0.0
  %1855 = vmatpush1.msra.mxu0 %v1830
  %1856 = vmatprep.subr.mxu0 0.0
  %1857 = vmatpush1.msra.mxu0 %v1831
  %1858 = vmatprep.subr.mxu0 0.0
  %1859 = vmatpush1.msra.mxu0 %v1832
  %1860 = vmatprep.subr.mxu0 0.0
  %1861 = vmatpush1.msra.mxu0 %v1833
  %1862 = vmatprep.subr.mxu0 0.0
  %1863 = vmatpush1.msra.mxu0 %v1834
  %1864 = vmatprep.subr.mxu0 0.0
  %1865 = vmatpush1.msra.mxu0 %v1835
  %1866 = vmatprep.subr.mxu0 0.0
  %1867 = vmatpush1.msra.mxu0 %v1836
  %1868 = vmatprep.subr.mxu0 0.0
  %1869 = vmatpush1.msra.mxu0 %v1837
  %1870 = vmatprep.subr.mxu0 0.0
  %1871 = vmatpush1.msra.mxu0 %v1838
  %1872 = vmatprep.subr.mxu0 0.0
  %1873 = vmatpush1.msra.mxu0 %v1839
  %1874 = vmatprep.subr.mxu0 0.0
  %1875 = vmatpush1.msra.mxu0 %v1840
  %1876 = vmatprep.subr.mxu0 0.0
  %1877 = vmatpush1.msra.mxu0 %v1841
  %1878 = vmatprep.subr.mxu0 0.0
  %1879 = vmatpush1.msra.mxu0 %v1842
  %1880 = vmatprep.subr.mxu0 0.0
  %1881 = vmatpush1.msra.mxu0 %v1843
  %1882 = vmatprep.subr.mxu0 0.0
  %1883 = vmatpush1.msra.mxu0 %v1844
  %1884 = vmatprep.subr.mxu0 0.0
  %1885 = vmatpush1.msra.mxu0 0.0
  %1886 = vmatprep.subr.mxu0 0.0
  %1887 = vmatpush1.msra.mxu0 0.0
  %1888 = vmatprep.subr.mxu0 0.0
  %1889 = vmatpush1.msra.mxu0 0.0
  %1890 = vmatprep.subr.mxu0 0.0
  %1891 = vmatpush1.msra.mxu0 0.0
  %1892 = vmatprep.subr.mxu0 0.0
  %1893 = vmatpush1.msra.mxu0 0.0
  %1894 = vmatprep.subr.mxu0 0.0
  %1895 = vmatpush1.msra.mxu0 0.0
  %1896 = vmatprep.subr.mxu0 0.0
  %1897 = vmatpush1.msra.mxu0 0.0
  %1898 = vmatprep.subr.mxu0 0.0
  %1899 = vmatpush1.msra.mxu0 0.0
  %1900 = vmatprep.subr.mxu0 0.0
  %1901 = vmatpush1.msra.mxu0 0.0
  %1902 = vmatprep.subr.mxu0 0.0
  %1903 = vmatpush1.msra.mxu0 0.0
  %1904 = vmatprep.subr.mxu0 0.0
  %1905 = vmatpush1.msra.mxu0 0.0
  %1906 = vmatprep.subr.mxu0 0.0
  %1907 = vmatpush1.msra.mxu0 0.0
  %1908 = vmatprep.subr.mxu0 0.0
  %1909 = vmatpush1.msra.mxu0 0.0
  %1910 = vmatprep.subr.mxu0 0.0
  %1911 = vmatpush1.msra.mxu0 0.0
  %1912 = vmatprep.subr.mxu0 0.0
  %1913 = vmatpush1.msra.mxu0 0.0
  %1914 = vmatprep.subr.mxu0 0.0
  %1915 = vmatpush1.msra.mxu0 0.0
  %1916 = vmatprep.mubr.f32.mxu0 0.0
  %1917 = vmatmul.mubr.f32.gmra.mrb[0].mxu0 %v1767
  %v1918 = vpop.f32.mrb[0].mxu0
  %v1919 = vadd.f32 %v1850, %v1918
  %v1920 = vpop.f32.mrb[0].mxu0
  %1921 = vmatprep.mubr.f32.mxu0 0.0
  %1922 = vmatmul.mubr.f32.gmra.mrb[0].mxu0 %v1770
  %v1923 = vpop.f32.mrb[0].mxu0
  %v1924 = vadd.f32 %v1850, %v1923
  %v1925 = vpop.f32.mrb[0].mxu0
  %1926 = vmatprep.mubr.f32.mxu0 0.0
  %1927 = vmatmul.mubr.f32.gmra.mrb[0].mxu0 %v1773
  %v1928 = vpop.f32.mrb[0].mxu0
  %v1929 = vadd.f32 %v1850, %v1928
  %v1930 = vpop.f32.mrb[0].mxu0
  %1931 = vmatprep.mubr.f32.mxu0 0.0
  %1932 = vmatmul.mubr.f32.gmra.mrb[0].mxu0 %v1776
  %v1933 = vpop.f32.mrb[0].mxu0
  %v1934 = vadd.f32 %v1850, %v1933
  %v1935 = vpop.f32.mrb[0].mxu0
  %1936 = vmatprep.mubr.f32.mxu0 0.0
  %1937 = vmatmul.mubr.f32.gmra.mrb[0].mxu0 %v1779
  %v1938 = vpop.f32.mrb[0].mxu0
  %v1939 = vadd.f32 %v1850, %v1938
  %v1940 = vpop.f32.mrb[0].mxu0
  %1941 = vmatprep.mubr.f32.mxu0 0.0
  %1942 = vmatmul.mubr.f32.gmra.mrb[0].mxu0 %v1782
  %v1943 = vpop.f32.mrb[0].mxu0
  %v1944 = vadd.f32 %v1850, %v1943
  %v1945 = vpop.f32.mrb[0].mxu0
  %1946 = vmatprep.mubr.f32.mxu0 0.0
  %1947 = vmatmul.mubr.f32.gmra.mrb[0].mxu0 %v1785
  %v1948 = vpop.f32.mrb[0].mxu0
  %v1949 = vadd.f32 %v1850, %v1948
  %v1950 = vpop.f32.mrb[0].mxu0
  %1951 = vmatprep.mubr.f32.mxu0 0.0
  %1952 = vmatmul.mubr.f32.gmra.mrb[0].mxu0 %v1788
  %v1953 = vpop.f32.mrb[0].mxu0
  %v1954 = vadd.f32 %v1850, %v1953
  %v1955 = vpop.f32.mrb[0].mxu0
  %1956 = vmatprep.mubr.f32.mxu0 0.0
  %1957 = vmatmul.mubr.f32.gmra.mrb[0].mxu0 %v1791
  %v1958 = vpop.f32.mrb[0].mxu0
  %v1959 = vadd.f32 %v1850, %v1958
  %v1960 = vpop.f32.mrb[0].mxu0
  %1961 = vmatprep.mubr.f32.mxu0 0.0
  %1962 = vmatmul.mubr.f32.gmra.mrb[0].mxu0 %v1794
  %v1963 = vpop.f32.mrb[0].mxu0
  %v1964 = vadd.f32 %v1850, %v1963
  %v1965 = vpop.f32.mrb[0].mxu0
  %1966 = vmatprep.mubr.f32.mxu0 0.0
  %1967 = vmatmul.mubr.f32.gmra.mrb[0].mxu0 %v1797
  %v1968 = vpop.f32.mrb[0].mxu0
  %v1969 = vadd.f32 %v1850, %v1968
  %v1970 = vpop.f32.mrb[0].mxu0
  %1971 = vmatprep.mubr.f32.mxu0 0.0
  %1972 = vmatmul.mubr.f32.gmra.mrb[0].mxu0 %v1800
  %v1973 = vpop.f32.mrb[0].mxu0
  %v1974 = vadd.f32 %v1850, %v1973
  %v1975 = vpop.f32.mrb[0].mxu0
  %1976 = vmatprep.mubr.f32.mxu0 0.0
  %1977 = vmatmul.mubr.f32.gmra.mrb[0].mxu0 %v1803
  %v1978 = vpop.f32.mrb[0].mxu0
  %v1979 = vadd.f32 %v1850, %v1978
  %v1980 = vpop.f32.mrb[0].mxu0
  %1981 = vmatprep.mubr.f32.mxu0 0.0
  %1982 = vmatmul.mubr.f32.gmra.mrb[0].mxu0 %v1806
  %v1983 = vpop.f32.mrb[0].mxu0
  %v1984 = vadd.f32 %v1850, %v1983
  %v1985 = vpop.f32.mrb[0].mxu0
  %1986 = vmatprep.mubr.f32.mxu0 0.0
  %1987 = vmatmul.mubr.f32.gmra.mrb[0].mxu0 %v1809
  %v1988 = vpop.f32.mrb[0].mxu0
  %v1989 = vadd.f32 %v1850, %v1988
  %v1990 = vpop.f32.mrb[0].mxu0
  %1991 = vmatprep.mubr.f32.mxu0 0.0
  %1992 = vmatmul.mubr.f32.gmra.mrb[0].mxu0 %v1812
  %v1993 = vpop.f32.mrb[0].mxu0
  %v1994 = vadd.f32 %v1850, %v1993
  %v1995 = vpop.f32.mrb[0].mxu0
  %1996 = vdwg.mxu0
  %v1997 = vpack.c.b16 %v1322, %v1320
  %v1998 = vpack.c.b16 %v1550, %v1548
  %v1999 = vpack.c.b16 %v1551, %v1549
  %v2000 = vpack.c.b16 %v1324, %v1322
  %v2001 = vpack.c.b16 %v1552, %v1550
  %v2002 = vpack.c.b16 %v1553, %v1551
  %v2003 = vpack.c.b16 %v1326, %v1324
  %v2004 = vpack.c.b16 %v1554, %v1552
  %v2005 = vpack.c.b16 %v1555, %v1553
  %v2006 = vpack.c.b16 %v1328, %v1326
  %v2007 = vpack.c.b16 %v1556, %v1554
  %v2008 = vpack.c.b16 %v1557, %v1555
  %v2009 = vpack.c.b16 %v1330, %v1328
  %v2010 = vpack.c.b16 %v1558, %v1556
  %v2011 = vpack.c.b16 %v1559, %v1557
  %v2012 = vpack.c.b16 %v1332, %v1330
  %v2013 = vpack.c.b16 %v1560, %v1558
  %v2014 = vpack.c.b16 %v1561, %v1559
  %v2015 = vpack.c.b16 %v1334, %v1332
  %v2016 = vpack.c.b16 %v1562, %v1560
  %v2017 = vpack.c.b16 %v1563, %v1561
  %v2018 = vpack.c.b16 %v1500, %v1334
  %v2019 = vpack.c.b16 %v1564, %v1562
  %v2020 = vpack.c.b16 %v1565, %v1563
  %v2021 = vpack.c.b16 %v1526, %v1500
  %v2022 = vpack.c.b16 %v1566, %v1564
  %v2023 = vpack.c.b16 %v1567, %v1565
  %v2024 = vpack.c.b16 %v1338, %v1336
  %v2025 = vpack.c.b16 %v1570, %v1568
  %v2026 = vpack.c.b16 %v1571, %v1569
  %v2027 = vpack.c.b16 %v1340, %v1338
  %v2028 = vpack.c.b16 %v1572, %v1570
  %v2029 = vpack.c.b16 %v1573, %v1571
  %v2030 = vpack.c.b16 %v1342, %v1340
  %v2031 = vpack.c.b16 %v1574, %v1572
  %v2032 = vpack.c.b16 %v1575, %v1573
  %v2033 = vpack.c.b16 %v1344, %v1342
  %v2034 = vpack.c.b16 %v1576, %v1574
  %v2035 = vpack.c.b16 %v1577, %v1575
  %v2036 = vpack.c.b16 %v1346, %v1344
  %v2037 = vpack.c.b16 %v1578, %v1576
  %v2038 = vpack.c.b16 %v1579, %v1577
  %v2039 = vpack.c.b16 %v1348, %v1346
  %v2040 = vpack.c.b16 %v1580, %v1578
  %v2041 = vpack.c.b16 %v1581, %v1579
  %v2042 = vpack.c.b16 %v1350, %v1348
  %v2043 = vpack.c.b16 %v1582, %v1580
  %v2044 = vpack.c.b16 %v1583, %v1581
  %v2045 = vpack.c.b16 %v1502, %v1350
  %v2046 = vpack.c.b16 %v1584, %v1582
  %v2047 = vpack.c.b16 %v1585, %v1583
  %v2048 = vpack.c.b16 %v1528, %v1502
  %v2049 = vpack.c.b16 %v1586, %v1584
  %v2050 = vpack.c.b16 %v1587, %v1585
  %v2249 = vunpack.c.l.b16 %v1588
  %v2250 = vunpack.c.l.b16 %v1589
  %v2251 = vunpack.c.l.b16 %v1590
  %v2252 = vunpack.c.l.b16 %v1591
  %v2253 = vunpack.c.l.b16 %v1592
  %v2254 = vunpack.c.l.b16 %v1593
  %v2255 = vunpack.c.l.b16 %v1594
  %v2256 = vunpack.c.l.b16 %v1595
  %v2257 = vunpack.c.l.b16 %v1596
  %v2258 = vunpack.c.l.b16 %v1597
  %v2259 = vunpack.c.l.b16 %v1598
  %v2260 = vunpack.c.l.b16 %v1599
  %v2261 = vunpack.c.l.b16 %v1600
  %v2262 = vunpack.c.l.b16 %v1601
  %v2263 = vunpack.c.l.b16 %v1602
  %v2264 = vunpack.c.l.b16 %v1603
  %v2265 = vunpack.c.l.b16 %v1604
  %v2266 = vunpack.c.l.b16 %v1605
  %v2267 = vunpack.c.l.b16 %v1606
  %v2268 = vunpack.c.l.b16 %v1607
  %v2269 = vunpack.c.l.b16 %v1608
  %v2270 = vunpack.c.l.b16 %v1609
  %v2271 = vunpack.c.l.b16 %v1610
  %v2272 = vunpack.c.l.b16 %v1611
  %v2273 = vunpack.c.l.b16 %v1612
  %v2274 = vunpack.c.l.b16 %v1613
  %v2275 = vunpack.c.l.b16 %v1614
  %v2276 = vunpack.c.l.b16 %v1615
  %v2277 = vunpack.c.l.b16 %v1616
  %v2278 = vunpack.c.l.b16 %v1617
  %v2279 = vunpack.c.l.b16 %v1618
  %v2280 = vunpack.c.l.b16 %v1619
  %v2281 = vunpack.c.l.b16 %v1620
  %v2282 = vunpack.c.l.b16 %v1621
  %v2283 = vunpack.c.l.b16 %v1622
  %v2284 = vunpack.c.l.b16 %v1623
  %v2285 = vunpack.c.l.b16 %v1624
  %v2286 = vunpack.c.l.b16 %v1625
  %v2287 = vunpack.c.l.b16 %v1626
  %v2288 = vunpack.c.l.b16 %v1627
  %v2289 = vunpack.c.l.b16 %v1628
  %v2290 = vunpack.c.l.b16 %v1629
  %v2291 = vunpack.c.l.b16 %v1630
  %v2292 = vunpack.c.l.b16 %v1631
  %v2293 = vunpack.c.l.b16 %v1632
  %v2294 = vunpack.c.l.b16 %v1633
  %v2295 = vunpack.c.l.b16 %v1634
  %v2296 = vunpack.c.l.b16 %v1635
  %v2297 = vunpack.c.l.b16 %v1636
  %v2298 = vunpack.c.l.b16 %v1637
  %v2299 = vunpack.c.l.b16 %v1638
  %v2300 = vunpack.c.l.b16 %v1639
  %v2301 = vunpack.c.l.b16 %v1640
  %v2302 = vunpack.c.l.b16 %v1641
  %v2303 = vunpack.c.l.b16 %v1642
  %v2304 = vunpack.c.l.b16 %v1643
  %v2305 = vunpack.c.l.b16 %v1644
  %v2306 = vunpack.c.l.b16 %v1645
  %v2307 = vunpack.c.l.b16 %v1646
  %v2308 = vunpack.c.l.b16 %v1647
  %v2309 = vunpack.c.l.b16 %v1648
  %v2310 = vunpack.c.l.b16 %v1649
  %v2311 = vunpack.c.l.b16 %v1650
  %v2312 = vunpack.c.l.b16 %v1651
  %v2313 = vunpack.c.l.b16 %v1652
  %v2314 = vunpack.c.l.b16 %v1653
  %v2315 = vunpack.c.l.b16 %v1654
  %v2316 = vunpack.c.l.b16 %v1655
  %v2317 = vunpack.c.l.b16 %v1656
  %v2318 = vunpack.c.l.b16 %v1657
  %v2319 = vunpack.c.l.b16 %v1658
  %v2320 = vunpack.c.l.b16 %v1659
  %v2321 = vunpack.c.l.b16 %v1660
  %v2322 = vunpack.c.l.b16 %v1661
  %v2323 = vunpack.c.l.b16 %v1662
  %v2324 = vunpack.c.l.b16 %v1663
  %v2325 = vunpack.c.l.b16 %v1664
  %v2326 = vunpack.c.l.b16 %v1665
  %v2327 = vunpack.c.l.b16 %v1666
  %v2328 = vunpack.c.l.b16 %v1667
  %v2329 = vunpack.c.l.b16 %v1668
  %v2330 = vunpack.c.l.b16 %v1669
  %v2331 = vunpack.c.l.b16 %v1670
  %v2332 = vunpack.c.l.b16 %v1671
  %v2333 = vunpack.c.l.b16 %v1672
  %v2334 = vunpack.c.l.b16 %v1673
  %v2335 = vunpack.c.l.b16 %v1674
  %v2336 = vunpack.c.l.b16 %v1675
  %v2337 = vunpack.c.l.b16 %v1676
  %v2338 = vunpack.c.l.b16 %v1677
  %v2339 = vunpack.c.l.b16 %v1678
  %v2340 = vunpack.c.l.b16 %v1679
  %v2341 = vunpack.c.l.b16 %v1680
  %v2342 = vunpack.c.l.b16 %v1681
  %v2343 = vunpack.c.l.b16 %v1682
  %v2344 = vunpack.c.l.b16 %v1683
  %v2345 = vunpack.c.l.b16 %v1684
  %v2346 = vunpack.c.l.b16 %v1685
  %v2347 = vunpack.c.l.b16 %v1686
  %v2348 = vunpack.c.l.b16 %v1687
  %v2349 = vunpack.c.l.b16 %v1688
  %v2350 = vunpack.c.l.b16 %v1689
  %v2351 = vunpack.c.l.b16 %v1690
  %v2352 = vunpack.c.l.b16 %v1691
  %v2353 = vunpack.c.l.b16 %v1692
  %v2354 = vunpack.c.l.b16 %v1693
  %v2355 = vunpack.c.l.b16 %v1694
  %v2356 = vunpack.c.l.b16 %v1695
  %v2357 = vunpack.c.l.b16 %v1696
  %v2358 = vunpack.c.l.b16 %v1697
  %v2359 = vunpack.c.l.b16 %v1698
  %v2360 = vunpack.c.l.b16 %v1699
  %v2361 = vunpack.c.l.b16 %v1700
  %v2362 = vunpack.c.l.b16 %v1701
  %v2363 = vunpack.c.l.b16 %v1702
  %v2364 = vunpack.c.l.b16 %v1703
  %v2365 = vunpack.c.l.b16 %v1704
  %v2366 = vunpack.c.l.b16 %v1705
  %v2367 = vunpack.c.l.b16 %v1706
  %v2368 = vunpack.c.l.b16 %v1707
  %v2369 = vunpack.c.l.b16 %v1708
  %v2370 = vunpack.c.l.b16 %v1709
  %v2371 = vunpack.c.l.b16 %v1710
  %v2372 = vunpack.c.l.b16 %v1711
  %v2373 = vunpack.c.l.b16 %v1712
  %v2374 = vunpack.c.l.b16 %v1713
  %v2375 = vunpack.c.l.b16 %v1714
  %v2376 = vunpack.c.l.b16 %v1715
  %v2377 = vunpack.c.l.b16 %v1716
  %v2378 = vunpack.c.l.b16 %v1717
  %v2379 = vunpack.c.l.b16 %v1718
  %v2380 = vunpack.c.l.b16 %v1719
  %v2381 = vunpack.c.l.b16 %v1720
  %v2382 = vunpack.c.l.b16 %v1721
  %v2383 = vunpack.c.l.b16 %v1722
  %v2384 = vunpack.c.l.b16 %v1723
  %v2385 = vunpack.c.l.b16 %v1724
  %v2386 = vunpack.c.l.b16 %v1725
  %v2387 = vunpack.c.l.b16 %v1726
  %v2388 = vunpack.c.l.b16 %v1727
  %v2389 = vunpack.c.l.b16 %v1728
  %v2390 = vunpack.c.l.b16 %v1729
  %v2391 = vunpack.c.l.b16 %v1730
  %v2392 = vunpack.c.l.b16 %v1731
  %v2393 = vpack.c.b16 %v2250, %v2249
  %v2394 = vpack.c.b16 %v2252, %v2251
  %v2395 = vpack.c.b16 %v2254, %v2253
  %v2396 = vpack.c.b16 %v2256, %v2255
  %v2397 = vpack.c.b16 %v2258, %v2257
  %v2398 = vpack.c.b16 %v2260, %v2259
  %v2399 = vpack.c.b16 %v2262, %v2261
  %v2400 = vpack.c.b16 %v2264, %v2263
  %v2401 = vpack.c.b16 %v2266, %v2265
  %v2402 = vpack.c.b16 %v2268, %v2267
  %v2403 = vpack.c.b16 %v2270, %v2269
  %v2404 = vpack.c.b16 %v2272, %v2271
  %v2405 = vpack.c.b16 %v2274, %v2273
  %v2406 = vpack.c.b16 %v2276, %v2275
  %v2407 = vpack.c.b16 %v2278, %v2277
  %v2408 = vpack.c.b16 %v2280, %v2279
  %v2409 = vpack.c.b16 %v2282, %v2281
  %v2410 = vpack.c.b16 %v2284, %v2283
  %v2411 = vpack.c.b16 %v2286, %v2285
  %v2412 = vpack.c.b16 %v2288, %v2287
  %v2413 = vpack.c.b16 %v2290, %v2289
  %v2414 = vpack.c.b16 %v2292, %v2291
  %v2415 = vpack.c.b16 %v2294, %v2293
  %v2416 = vpack.c.b16 %v2296, %v2295
  %v2417 = vpack.c.b16 %v2298, %v2297
  %v2418 = vpack.c.b16 %v2300, %v2299
  %v2419 = vpack.c.b16 %v2302, %v2301
  %v2420 = vpack.c.b16 %v2304, %v2303
  %v2421 = vpack.c.b16 %v2306, %v2305
  %v2422 = vpack.c.b16 %v2308, %v2307
  %v2423 = vpack.c.b16 %v2310, %v2309
  %v2424 = vpack.c.b16 %v2312, %v2311
  %v2425 = vpack.c.b16 %v2314, %v2313
  %v2426 = vpack.c.b16 %v2316, %v2315
  %v2427 = vpack.c.b16 %v2318, %v2317
  %v2428 = vpack.c.b16 %v2320, %v2319
  %v2429 = vpack.c.b16 %v2322, %v2321
  %v2430 = vpack.c.b16 %v2324, %v2323
  %v2431 = vpack.c.b16 %v2326, %v2325
  %v2432 = vpack.c.b16 %v2328, %v2327
  %v2433 = vpack.c.b16 %v2330, %v2329
  %v2434 = vpack.c.b16 %v2332, %v2331
  %v2435 = vpack.c.b16 %v2334, %v2333
  %v2436 = vpack.c.b16 %v2336, %v2335
  %v2437 = vpack.c.b16 %v2338, %v2337
  %v2438 = vpack.c.b16 %v2340, %v2339
  %v2439 = vpack.c.b16 %v2342, %v2341
  %v2440 = vpack.c.b16 %v2344, %v2343
  %v2441 = vpack.c.b16 %v2346, %v2345
  %v2442 = vpack.c.b16 %v2348, %v2347
  %v2443 = vpack.c.b16 %v2350, %v2349
  %v2444 = vpack.c.b16 %v2352, %v2351
  %v2445 = vpack.c.b16 %v2354, %v2353
  %v2446 = vpack.c.b16 %v2356, %v2355
  %v2447 = vpack.c.b16 %v2358, %v2357
  %v2448 = vpack.c.b16 %v2360, %v2359
  %v2449 = vpack.c.b16 %v2362, %v2361
  %v2450 = vpack.c.b16 %v2364, %v2363
  %v2451 = vpack.c.b16 %v2366, %v2365
  %v2452 = vpack.c.b16 %v2368, %v2367
  %v2453 = vpack.c.b16 %v2370, %v2369
  %v2454 = vpack.c.b16 %v2372, %v2371
  %v2455 = vpack.c.b16 %v2374, %v2373
  %v2456 = vpack.c.b16 %v2376, %v2375
  %v2457 = vpack.c.b16 %v2378, %v2377
  %v2458 = vpack.c.b16 %v2380, %v2379
  %v2459 = vpack.c.b16 %v2382, %v2381
  %v2460 = vpack.c.b16 %v2384, %v2383
  %v2461 = vpack.c.b16 %v2386, %v2385
  %v2462 = vpack.c.b16 %v2388, %v2387
  %v2463 = vpack.c.b16 %v2390, %v2389
  %v2464 = vpack.c.b16 %v2392, %v2391
  %2537 = vmatprep.subr.bf16.mxu0 0
  %2538 = vmatpush1.bf16.msra.mxu0 %v2393
  %2539 = vmatprep.subr.bf16.mxu0 0
  %2540 = vmatpush1.bf16.msra.mxu0 %v2394
  %2541 = vmatprep.subr.bf16.mxu0 0
  %2542 = vmatpush1.bf16.msra.mxu0 %v2395
  %2543 = vmatprep.subr.bf16.mxu0 0
  %2544 = vmatpush1.bf16.msra.mxu0 %v2396
  %2545 = vmatprep.subr.bf16.mxu0 0
  %2546 = vmatpush1.bf16.msra.mxu0 %v2397
  %2547 = vmatprep.subr.bf16.mxu0 0
  %2548 = vmatpush1.bf16.msra.mxu0 %v2398
  %2549 = vmatprep.subr.bf16.mxu0 0
  %2550 = vmatpush1.bf16.msra.mxu0 %v2399
  %2551 = vmatprep.subr.bf16.mxu0 0
  %2552 = vmatpush1.bf16.msra.mxu0 %v2400
  %2553 = vmatprep.subr.bf16.mxu0 0
  %2554 = vmatpush1.bf16.msra.mxu0 %v2401
  %2555 = vmatprep.subr.bf16.mxu0 0
  %2556 = vmatpush1.bf16.msra.mxu0 %v2402
  %2557 = vmatprep.subr.bf16.mxu0 0
  %2558 = vmatpush1.bf16.msra.mxu0 %v2403
  %2559 = vmatprep.subr.bf16.mxu0 0
  %2560 = vmatpush1.bf16.msra.mxu0 %v2404
  %2561 = vmatprep.subr.bf16.mxu0 0
  %2562 = vmatpush1.bf16.msra.mxu0 %v2405
  %2563 = vmatprep.subr.bf16.mxu0 0
  %2564 = vmatpush1.bf16.msra.mxu0 %v2406
  %2565 = vmatprep.subr.bf16.mxu0 0
  %2566 = vmatpush1.bf16.msra.mxu0 %v2407
  %2567 = vmatprep.subr.bf16.mxu0 0
  %2568 = vmatpush1.bf16.msra.mxu0 %v2408
  %2569 = vmatprep.mubr.bf16.mxu0 %v1998
  %2570 = vmatmul.mubr.bf16.gmra.mrb[0].mxu0 %v1997
  %v2571 = vpop.f32.mrb[0].mxu0
  %v2572 = vadd.f32 %v1919, %v2571
  %v2573 = vpop.f32.mrb[0].mxu0
  %v2574 = vpop.f32.mrb[0].mxu0
  %v2575 = vadd.f32 %v1924, %v2574
  %v2576 = vpop.f32.mrb[0].mxu0
  %2577 = vmatprep.mubr.bf16.mxu0 %v2004
  %2578 = vmatmul.mubr.bf16.gmra.mrb[0].mxu0 %v2003
  %v2579 = vpop.f32.mrb[0].mxu0
  %v2580 = vadd.f32 %v1929, %v2579
  %v2581 = vpop.f32.mrb[0].mxu0
  %v2582 = vpop.f32.mrb[0].mxu0
  %v2583 = vadd.f32 %v1934, %v2582
  %v2584 = vpop.f32.mrb[0].mxu0
  %2585 = vmatprep.mubr.bf16.mxu0 %v2010
  %2586 = vmatmul.mubr.bf16.gmra.mrb[0].mxu0 %v2009
  %v2587 = vpop.f32.mrb[0].mxu0
  %v2588 = vadd.f32 %v1939, %v2587
  %v2589 = vpop.f32.mrb[0].mxu0
  %v2590 = vpop.f32.mrb[0].mxu0
  %v2591 = vadd.f32 %v1944, %v2590
  %v2592 = vpop.f32.mrb[0].mxu0
  %2593 = vmatprep.mubr.bf16.mxu0 %v2016
  %2594 = vmatmul.mubr.bf16.gmra.mrb[0].mxu0 %v2015
  %v2595 = vpop.f32.mrb[0].mxu0
  %v2596 = vadd.f32 %v1949, %v2595
  %v2597 = vpop.f32.mrb[0].mxu0
  %v2598 = vpop.f32.mrb[0].mxu0
  %v2599 = vadd.f32 %v1954, %v2598
  %v2600 = vpop.f32.mrb[0].mxu0
  %2601 = vmatprep.mubr.bf16.mxu0 %v2025
  %2602 = vmatmul.mubr.bf16.gmra.mrb[0].mxu0 %v2024
  %v2603 = vpop.f32.mrb[0].mxu0
  %v2604 = vadd.f32 %v1959, %v2603
  %v2605 = vpop.f32.mrb[0].mxu0
  %v2606 = vpop.f32.mrb[0].mxu0
  %v2607 = vadd.f32 %v1964, %v2606
  %v2608 = vpop.f32.mrb[0].mxu0
  %2609 = vmatprep.mubr.bf16.mxu0 %v2031
  %2610 = vmatmul.mubr.bf16.gmra.mrb[0].mxu0 %v2030
  %v2611 = vpop.f32.mrb[0].mxu0
  %v2612 = vadd.f32 %v1969, %v2611
  %v2613 = vpop.f32.mrb[0].mxu0
  %v2614 = vpop.f32.mrb[0].mxu0
  %v2615 = vadd.f32 %v1974, %v2614
  %v2616 = vpop.f32.mrb[0].mxu0
  %2617 = vmatprep.mubr.bf16.mxu0 %v2037
  %2618 = vmatmul.mubr.bf16.gmra.mrb[0].mxu0 %v2036
  %v2619 = vpop.f32.mrb[0].mxu0
  %v2620 = vadd.f32 %v1979, %v2619
  %v2621 = vpop.f32.mrb[0].mxu0
  %v2622 = vpop.f32.mrb[0].mxu0
  %v2623 = vadd.f32 %v1984, %v2622
  %v2624 = vpop.f32.mrb[0].mxu0
  %2625 = vmatprep.mubr.bf16.mxu0 %v2043
  %2626 = vmatmul.mubr.bf16.gmra.mrb[0].mxu0 %v2042
  %v2627 = vpop.f32.mrb[0].mxu0
  %v2628 = vadd.f32 %v1989, %v2627
  %v2629 = vpop.f32.mrb[0].mxu0
  %v2630 = vpop.f32.mrb[0].mxu0
  %v2631 = vadd.f32 %v1994, %v2630
  %v2632 = vpop.f32.mrb[0].mxu0
  %2633 = vdwg.mxu0
  %2634 = vmatprep.subr.bf16.mxu0 0
  %2635 = vmatpush1.bf16.msra.mxu0 %v2409
  %2636 = vmatprep.subr.bf16.mxu0 0
  %2637 = vmatpush1.bf16.msra.mxu0 %v2410
  %2638 = vmatprep.subr.bf16.mxu0 0
  %2639 = vmatpush1.bf16.msra.mxu0 %v2411
  %2640 = vmatprep.subr.bf16.mxu0 0
  %2641 = vmatpush1.bf16.msra.mxu0 %v2412
  %2642 = vmatprep.subr.bf16.mxu0 0
  %2643 = vmatpush1.bf16.msra.mxu0 %v2413
  %2644 = vmatprep.subr.bf16.mxu0 0
  %2645 = vmatpush1.bf16.msra.mxu0 %v2414
  %2646 = vmatprep.subr.bf16.mxu0 0
  %2647 = vmatpush1.bf16.msra.mxu0 %v2415
  %2648 = vmatprep.subr.bf16.mxu0 0
  %2649 = vmatpush1.bf16.msra.mxu0 %v2416
  %2650 = vmatprep.subr.bf16.mxu0 0
  %2651 = vmatpush1.bf16.msra.mxu0 %v2417
  %2652 = vmatprep.subr.bf16.mxu0 0
  %2653 = vmatpush1.bf16.msra.mxu0 %v2418
  %2654 = vmatprep.subr.bf16.mxu0 0
  %2655 = vmatpush1.bf16.msra.mxu0 %v2419
  %2656 = vmatprep.subr.bf16.mxu0 0
  %2657 = vmatpush1.bf16.msra.mxu0 %v2420
  %2658 = vmatprep.subr.bf16.mxu0 0
  %2659 = vmatpush1.bf16.msra.mxu0 %v2421
  %2660 = vmatprep.subr.bf16.mxu0 0
  %2661 = vmatpush1.bf16.msra.mxu0 %v2422
  %2662 = vmatprep.subr.bf16.mxu0 0
  %2663 = vmatpush1.bf16.msra.mxu0 %v2423
  %2664 = vmatprep.subr.bf16.mxu0 0
  %2665 = vmatpush1.bf16.msra.mxu0 %v2424
  %2666 = vmatprep.mubr.bf16.mxu0 %v2000
  %2667 = vmatmul.mubr.bf16.gmra.mrb[0].mxu0 %v1999
  %v2668 = vpop.f32.mrb[0].mxu0
  %v2669 = vadd.f32 %v2572, %v2668
  %v2670 = vpop.f32.mrb[0].mxu0
  %v2671 = vpop.f32.mrb[0].mxu0
  %v2672 = vadd.f32 %v2575, %v2671
  %v2673 = vpop.f32.mrb[0].mxu0
  %2674 = vmatprep.mubr.bf16.mxu0 %v2006
  %2675 = vmatmul.mubr.bf16.gmra.mrb[0].mxu0 %v2005
  %v2676 = vpop.f32.mrb[0].mxu0
  %v2677 = vadd.f32 %v2580, %v2676
  %v2678 = vpop.f32.mrb[0].mxu0
  %v2679 = vpop.f32.mrb[0].mxu0
  %v2680 = vadd.f32 %v2583, %v2679
  %v2681 = vpop.f32.mrb[0].mxu0
  %2682 = vmatprep.mubr.bf16.mxu0 %v2012
  %2683 = vmatmul.mubr.bf16.gmra.mrb[0].mxu0 %v2011
  %v2684 = vpop.f32.mrb[0].mxu0
  %v2685 = vadd.f32 %v2588, %v2684
  %v2686 = vpop.f32.mrb[0].mxu0
  %v2687 = vpop.f32.mrb[0].mxu0
  %v2688 = vadd.f32 %v2591, %v2687
  %v2689 = vpop.f32.mrb[0].mxu0
  %2690 = vmatprep.mubr.bf16.mxu0 %v2018
  %2691 = vmatmul.mubr.bf16.gmra.mrb[0].mxu0 %v2017
  %v2692 = vpop.f32.mrb[0].mxu0
  %v2693 = vadd.f32 %v2596, %v2692
  %v2694 = vpop.f32.mrb[0].mxu0
  %v2695 = vpop.f32.mrb[0].mxu0
  %v2696 = vadd.f32 %v2599, %v2695
  %v2697 = vpop.f32.mrb[0].mxu0
  %2698 = vmatprep.mubr.bf16.mxu0 %v2027
  %2699 = vmatmul.mubr.bf16.gmra.mrb[0].mxu0 %v2026
  %v2700 = vpop.f32.mrb[0].mxu0
  %v2701 = vadd.f32 %v2604, %v2700
  %v2702 = vpop.f32.mrb[0].mxu0
  %v2703 = vpop.f32.mrb[0].mxu0
  %v2704 = vadd.f32 %v2607, %v2703
  %v2705 = vpop.f32.mrb[0].mxu0
  %2706 = vmatprep.mubr.bf16.mxu0 %v2033
  %2707 = vmatmul.mubr.bf16.gmra.mrb[0].mxu0 %v2032
  %v2708 = vpop.f32.mrb[0].mxu0
  %v2709 = vadd.f32 %v2612, %v2708
  %v2710 = vpop.f32.mrb[0].mxu0
  %v2711 = vpop.f32.mrb[0].mxu0
  %v2712 = vadd.f32 %v2615, %v2711
  %v2713 = vpop.f32.mrb[0].mxu0
  %2714 = vmatprep.mubr.bf16.mxu0 %v2039
  %2715 = vmatmul.mubr.bf16.gmra.mrb[0].mxu0 %v2038
  %v2716 = vpop.f32.mrb[0].mxu0
  %v2717 = vadd.f32 %v2620, %v2716
  %v2718 = vpop.f32.mrb[0].mxu0
  %v2719 = vpop.f32.mrb[0].mxu0
  %v2720 = vadd.f32 %v2623, %v2719
  %v2721 = vpop.f32.mrb[0].mxu0
  %2722 = vmatprep.mubr.bf16.mxu0 %v2045
  %2723 = vmatmul.mubr.bf16.gmra.mrb[0].mxu0 %v2044
  %v2724 = vpop.f32.mrb[0].mxu0
  %v2725 = vadd.f32 %v2628, %v2724
  %v2726 = vpop.f32.mrb[0].mxu0
  %v2727 = vpop.f32.mrb[0].mxu0
  %v2728 = vadd.f32 %v2631, %v2727
  %v2729 = vpop.f32.mrb[0].mxu0
  %2730 = vdwg.mxu0
  %2731 = vmatprep.subr.bf16.mxu0 0
  %2732 = vmatpush1.bf16.msra.mxu0 %v2425
  %2733 = vmatprep.subr.bf16.mxu0 0
  %2734 = vmatpush1.bf16.msra.mxu0 %v2426
  %2735 = vmatprep.subr.bf16.mxu0 0
  %2736 = vmatpush1.bf16.msra.mxu0 %v2427
  %2737 = vmatprep.subr.bf16.mxu0 0
  %2738 = vmatpush1.bf16.msra.mxu0 %v2428
  %2739 = vmatprep.subr.bf16.mxu0 0
  %2740 = vmatpush1.bf16.msra.mxu0 %v2429
  %2741 = vmatprep.subr.bf16.mxu0 0
  %2742 = vmatpush1.bf16.msra.mxu0 %v2430
  %2743 = vmatprep.subr.bf16.mxu0 0
  %2744 = vmatpush1.bf16.msra.mxu0 %v2431
  %2745 = vmatprep.subr.bf16.mxu0 0
  %2746 = vmatpush1.bf16.msra.mxu0 %v2432
  %2747 = vmatprep.subr.bf16.mxu0 0
  %2748 = vmatpush1.bf16.msra.mxu0 %v2433
  %2749 = vmatprep.subr.bf16.mxu0 0
  %2750 = vmatpush1.bf16.msra.mxu0 %v2434
  %2751 = vmatprep.subr.bf16.mxu0 0
  %2752 = vmatpush1.bf16.msra.mxu0 %v2435
  %2753 = vmatprep.subr.bf16.mxu0 0
  %2754 = vmatpush1.bf16.msra.mxu0 %v2436
  %2755 = vmatprep.subr.bf16.mxu0 0
  %2756 = vmatpush1.bf16.msra.mxu0 %v2437
  %2757 = vmatprep.subr.bf16.mxu0 0
  %2758 = vmatpush1.bf16.msra.mxu0 %v2438
  %2759 = vmatprep.subr.bf16.mxu0 0
  %2760 = vmatpush1.bf16.msra.mxu0 %v2439
  %2761 = vmatprep.subr.bf16.mxu0 0
  %2762 = vmatpush1.bf16.msra.mxu0 %v2440
  %2763 = vmatprep.mubr.bf16.mxu0 %v2002
  %2764 = vmatmul.mubr.bf16.gmra.mrb[0].mxu0 %v2001
  %v2765 = vpop.f32.mrb[0].mxu0
  %v2766 = vadd.f32 %v2669, %v2765
  %v2767 = vpop.f32.mrb[0].mxu0
  %v2768 = vpop.f32.mrb[0].mxu0
  %v2769 = vadd.f32 %v2672, %v2768
  %v2770 = vpop.f32.mrb[0].mxu0
  %2771 = vmatprep.mubr.bf16.mxu0 %v2008
  %2772 = vmatmul.mubr.bf16.gmra.mrb[0].mxu0 %v2007
  %v2773 = vpop.f32.mrb[0].mxu0
  %v2774 = vadd.f32 %v2677, %v2773
  %v2775 = vpop.f32.mrb[0].mxu0
  %v2776 = vpop.f32.mrb[0].mxu0
  %v2777 = vadd.f32 %v2680, %v2776
  %v2778 = vpop.f32.mrb[0].mxu0
  %2779 = vmatprep.mubr.bf16.mxu0 %v2014
  %2780 = vmatmul.mubr.bf16.gmra.mrb[0].mxu0 %v2013
  %v2781 = vpop.f32.mrb[0].mxu0
  %v2782 = vadd.f32 %v2685, %v2781
  %v2783 = vpop.f32.mrb[0].mxu0
  %v2784 = vpop.f32.mrb[0].mxu0
  %v2785 = vadd.f32 %v2688, %v2784
  %v2786 = vpop.f32.mrb[0].mxu0
  %2787 = vmatprep.mubr.bf16.mxu0 %v2020
  %2788 = vmatmul.mubr.bf16.gmra.mrb[0].mxu0 %v2019
  %v2789 = vpop.f32.mrb[0].mxu0
  %v2790 = vadd.f32 %v2693, %v2789
  %v2791 = vpop.f32.mrb[0].mxu0
  %v2792 = vpop.f32.mrb[0].mxu0
  %v2793 = vadd.f32 %v2696, %v2792
  %v2794 = vpop.f32.mrb[0].mxu0
  %2795 = vmatprep.mubr.bf16.mxu0 %v2029
  %2796 = vmatmul.mubr.bf16.gmra.mrb[0].mxu0 %v2028
  %v2797 = vpop.f32.mrb[0].mxu0
  %v2798 = vadd.f32 %v2701, %v2797
  %v2799 = vpop.f32.mrb[0].mxu0
  %v2800 = vpop.f32.mrb[0].mxu0
  %v2801 = vadd.f32 %v2704, %v2800
  %v2802 = vpop.f32.mrb[0].mxu0
  %2803 = vmatprep.mubr.bf16.mxu0 %v2035
  %2804 = vmatmul.mubr.bf16.gmra.mrb[0].mxu0 %v2034
  %v2805 = vpop.f32.mrb[0].mxu0
  %v2806 = vadd.f32 %v2709, %v2805
  %v2807 = vpop.f32.mrb[0].mxu0
  %v2808 = vpop.f32.mrb[0].mxu0
  %v2809 = vadd.f32 %v2712, %v2808
  %v2810 = vpop.f32.mrb[0].mxu0
  %2811 = vmatprep.mubr.bf16.mxu0 %v2041
  %2812 = vmatmul.mubr.bf16.gmra.mrb[0].mxu0 %v2040
  %v2813 = vpop.f32.mrb[0].mxu0
  %v2814 = vadd.f32 %v2717, %v2813
  %v2815 = vpop.f32.mrb[0].mxu0
  %v2816 = vpop.f32.mrb[0].mxu0
  %v2817 = vadd.f32 %v2720, %v2816
  %v2818 = vpop.f32.mrb[0].mxu0
  %2819 = vmatprep.mubr.bf16.mxu0 %v2047
  %2820 = vmatmul.mubr.bf16.gmra.mrb[0].mxu0 %v2046
  %v2821 = vpop.f32.mrb[0].mxu0
  %v2822 = vadd.f32 %v2725, %v2821
  %v2823 = vpop.f32.mrb[0].mxu0
  %v2824 = vpop.f32.mrb[0].mxu0
  %v2825 = vadd.f32 %v2728, %v2824
  %v2826 = vpop.f32.mrb[0].mxu0
  %2827 = vdwg.mxu0
  %2828 = vmatprep.subr.bf16.mxu0 0
  %2829 = vmatpush1.bf16.msra.mxu0 %v2441
  %2830 = vmatprep.subr.bf16.mxu0 0
  %2831 = vmatpush1.bf16.msra.mxu0 %v2442
  %2832 = vmatprep.subr.bf16.mxu0 0
  %2833 = vmatpush1.bf16.msra.mxu0 %v2443
  %2834 = vmatprep.subr.bf16.mxu0 0
  %2835 = vmatpush1.bf16.msra.mxu0 %v2444
  %2836 = vmatprep.subr.bf16.mxu0 0
  %2837 = vmatpush1.bf16.msra.mxu0 %v2445
  %2838 = vmatprep.subr.bf16.mxu0 0
  %2839 = vmatpush1.bf16.msra.mxu0 %v2446
  %2840 = vmatprep.subr.bf16.mxu0 0
  %2841 = vmatpush1.bf16.msra.mxu0 %v2447
  %2842 = vmatprep.subr.bf16.mxu0 0
  %2843 = vmatpush1.bf16.msra.mxu0 %v2448
  %2844 = vmatprep.subr.bf16.mxu0 0
  %2845 = vmatpush1.bf16.msra.mxu0 %v2449
  %2846 = vmatprep.subr.bf16.mxu0 0
  %2847 = vmatpush1.bf16.msra.mxu0 %v2450
  %2848 = vmatprep.subr.bf16.mxu0 0
  %2849 = vmatpush1.bf16.msra.mxu0 %v2451
  %2850 = vmatprep.subr.bf16.mxu0 0
  %2851 = vmatpush1.bf16.msra.mxu0 %v2452
  %2852 = vmatprep.subr.bf16.mxu0 0
  %2853 = vmatpush1.bf16.msra.mxu0 %v2453
  %2854 = vmatprep.subr.bf16.mxu0 0
  %2855 = vmatpush1.bf16.msra.mxu0 %v2454
  %2856 = vmatprep.subr.bf16.mxu0 0
  %2857 = vmatpush1.bf16.msra.mxu0 %v2455
  %2858 = vmatprep.subr.bf16.mxu0 0
  %2859 = vmatpush1.bf16.msra.mxu0 %v2456
  %2860 = vmatprep.mubr.bf16.mxu0 %v2004
  %2861 = vmatmul.mubr.bf16.gmra.mrb[0].mxu0 %v2003
  %v2862 = vpop.f32.mrb[0].mxu0
  %v2863 = vadd.f32 %v2766, %v2862
  %v2864 = vpop.f32.mrb[0].mxu0
  %v2865 = vpop.f32.mrb[0].mxu0
  %v2866 = vadd.f32 %v2769, %v2865
  %v2867 = vpop.f32.mrb[0].mxu0
  %2868 = vmatprep.mubr.bf16.mxu0 %v2010
  %2869 = vmatmul.mubr.bf16.gmra.mrb[0].mxu0 %v2009
  %v2870 = vpop.f32.mrb[0].mxu0
  %v2871 = vadd.f32 %v2774, %v2870
  %v2872 = vpop.f32.mrb[0].mxu0
  %v2873 = vpop.f32.mrb[0].mxu0
  %v2874 = vadd.f32 %v2777, %v2873
  %v2875 = vpop.f32.mrb[0].mxu0
  %2876 = vmatprep.mubr.bf16.mxu0 %v2016
  %2877 = vmatmul.mubr.bf16.gmra.mrb[0].mxu0 %v2015
  %v2878 = vpop.f32.mrb[0].mxu0
  %v2879 = vadd.f32 %v2782, %v2878
  %v2880 = vpop.f32.mrb[0].mxu0
  %v2881 = vpop.f32.mrb[0].mxu0
  %v2882 = vadd.f32 %v2785, %v2881
  %v2883 = vpop.f32.mrb[0].mxu0
  %2884 = vmatprep.mubr.bf16.mxu0 %v2022
  %2885 = vmatmul.mubr.bf16.gmra.mrb[0].mxu0 %v2021
  %v2886 = vpop.f32.mrb[0].mxu0
  %v2887 = vadd.f32 %v2790, %v2886
  %v2888 = vpop.f32.mrb[0].mxu0
  %v2889 = vpop.f32.mrb[0].mxu0
  %v2890 = vadd.f32 %v2793, %v2889
  %v2891 = vpop.f32.mrb[0].mxu0
  %2892 = vmatprep.mubr.bf16.mxu0 %v2031
  %2893 = vmatmul.mubr.bf16.gmra.mrb[0].mxu0 %v2030
  %v2894 = vpop.f32.mrb[0].mxu0
  %v2895 = vadd.f32 %v2798, %v2894
  %v2896 = vpop.f32.mrb[0].mxu0
  %v2897 = vpop.f32.mrb[0].mxu0
  %v2898 = vadd.f32 %v2801, %v2897
  %v2899 = vpop.f32.mrb[0].mxu0
  %2900 = vmatprep.mubr.bf16.mxu0 %v2037
  %2901 = vmatmul.mubr.bf16.gmra.mrb[0].mxu0 %v2036
  %v2902 = vpop.f32.mrb[0].mxu0
  %v2903 = vadd.f32 %v2806, %v2902
  %v2904 = vpop.f32.mrb[0].mxu0
  %v2905 = vpop.f32.mrb[0].mxu0
  %v2906 = vadd.f32 %v2809, %v2905
  %v2907 = vpop.f32.mrb[0].mxu0
  %2908 = vmatprep.mubr.bf16.mxu0 %v2043
  %2909 = vmatmul.mubr.bf16.gmra.mrb[0].mxu0 %v2042
  %v2910 = vpop.f32.mrb[0].mxu0
  %v2911 = vadd.f32 %v2814, %v2910
  %v2912 = vpop.f32.mrb[0].mxu0
  %v2913 = vpop.f32.mrb[0].mxu0
  %v2914 = vadd.f32 %v2817, %v2913
  %v2915 = vpop.f32.mrb[0].mxu0
  %2916 = vmatprep.mubr.bf16.mxu0 %v2049
  %2917 = vmatmul.mubr.bf16.gmra.mrb[0].mxu0 %v2048
  %v2918 = vpop.f32.mrb[0].mxu0
  %v2919 = vadd.f32 %v2822, %v2918
  %v2920 = vpop.f32.mrb[0].mxu0
  %v2921 = vpop.f32.mrb[0].mxu0
  %v2922 = vadd.f32 %v2825, %v2921
  %v2923 = vpop.f32.mrb[0].mxu0
  %2924 = vdwg.mxu0
  %2925 = vmatprep.subr.bf16.mxu0 0
  %2926 = vmatpush1.bf16.msra.mxu0 %v2457
  %2927 = vmatprep.subr.bf16.mxu0 0
  %2928 = vmatpush1.bf16.msra.mxu0 %v2458
  %2929 = vmatprep.subr.bf16.mxu0 0
  %2930 = vmatpush1.bf16.msra.mxu0 %v2459
  %2931 = vmatprep.subr.bf16.mxu0 0
  %2932 = vmatpush1.bf16.msra.mxu0 %v2460
  %2933 = vmatprep.subr.bf16.mxu0 0
  %2934 = vmatpush1.bf16.msra.mxu0 %v2461
  %2935 = vmatprep.subr.bf16.mxu0 0
  %2936 = vmatpush1.bf16.msra.mxu0 %v2462
  %2937 = vmatprep.subr.bf16.mxu0 0
  %2938 = vmatpush1.bf16.msra.mxu0 %v2463
  %2939 = vmatprep.subr.bf16.mxu0 0
  %2940 = vmatpush1.bf16.msra.mxu0 %v2464
  %2941 = vmatprep.subr.bf16.mxu0 0
  %2942 = vmatpush1.bf16.msra.mxu0 0
  %2943 = vmatprep.subr.bf16.mxu0 0
  %2944 = vmatpush1.bf16.msra.mxu0 0
  %2945 = vmatprep.subr.bf16.mxu0 0
  %2946 = vmatpush1.bf16.msra.mxu0 0
  %2947 = vmatprep.subr.bf16.mxu0 0
  %2948 = vmatpush1.bf16.msra.mxu0 0
  %2949 = vmatprep.subr.bf16.mxu0 0
  %2950 = vmatpush1.bf16.msra.mxu0 0
  %2951 = vmatprep.subr.bf16.mxu0 0
  %2952 = vmatpush1.bf16.msra.mxu0 0
  %2953 = vmatprep.subr.bf16.mxu0 0
  %2954 = vmatpush1.bf16.msra.mxu0 0
  %2955 = vmatprep.subr.bf16.mxu0 0
  %2956 = vmatpush1.bf16.msra.mxu0 0
  %2957 = vmatprep.mubr.bf16.mxu0 0
  %2958 = vmatmul.mubr.bf16.gmra.mrb[0].mxu0 %v2005
  %v2959 = vpop.f32.mrb[0].mxu0
  %v2960 = vadd.f32 %v2863, %v2959
  %v2961 = vpop.f32.mrb[0].mxu0
  %v2962 = vpop.f32.mrb[0].mxu0
  %v2963 = vadd.f32 %v2866, %v2962
  %v2964 = vpop.f32.mrb[0].mxu0
  %2965 = vmatprep.mubr.bf16.mxu0 0
  %2966 = vmatmul.mubr.bf16.gmra.mrb[0].mxu0 %v2011
  %v2967 = vpop.f32.mrb[0].mxu0
  %v2968 = vadd.f32 %v2871, %v2967
  %v2969 = vpop.f32.mrb[0].mxu0
  %v2970 = vpop.f32.mrb[0].mxu0
  %v2971 = vadd.f32 %v2874, %v2970
  %v2972 = vpop.f32.mrb[0].mxu0
  %2973 = vmatprep.mubr.bf16.mxu0 0
  %2974 = vmatmul.mubr.bf16.gmra.mrb[0].mxu0 %v2017
  %v2975 = vpop.f32.mrb[0].mxu0
  %v2976 = vadd.f32 %v2879, %v2975
  %v2977 = vpop.f32.mrb[0].mxu0
  %v2978 = vpop.f32.mrb[0].mxu0
  %v2979 = vadd.f32 %v2882, %v2978
  %v2980 = vpop.f32.mrb[0].mxu0
  %2981 = vmatprep.mubr.bf16.mxu0 0
  %2982 = vmatmul.mubr.bf16.gmra.mrb[0].mxu0 %v2023
  %v2983 = vpop.f32.mrb[0].mxu0
  %v2984 = vadd.f32 %v2887, %v2983
  %v2985 = vpop.f32.mrb[0].mxu0
  %v2986 = vpop.f32.mrb[0].mxu0
  %v2987 = vadd.f32 %v2890, %v2986
  %v2988 = vpop.f32.mrb[0].mxu0
  %2989 = vmatprep.mubr.bf16.mxu0 0
  %2990 = vmatmul.mubr.bf16.gmra.mrb[0].mxu0 %v2032
  %v2991 = vpop.f32.mrb[0].mxu0
  %v2992 = vadd.f32 %v2895, %v2991
  %v2993 = vpop.f32.mrb[0].mxu0
  %v2994 = vpop.f32.mrb[0].mxu0
  %v2995 = vadd.f32 %v2898, %v2994
  %v2996 = vpop.f32.mrb[0].mxu0
  %2997 = vmatprep.mubr.bf16.mxu0 0
  %2998 = vmatmul.mubr.bf16.gmra.mrb[0].mxu0 %v2038
  %v2999 = vpop.f32.mrb[0].mxu0
  %v3000 = vadd.f32 %v2903, %v2999
  %v3001 = vpop.f32.mrb[0].mxu0
  %v3002 = vpop.f32.mrb[0].mxu0
  %v3003 = vadd.f32 %v2906, %v3002
  %v3004 = vpop.f32.mrb[0].mxu0
  %3005 = vmatprep.mubr.bf16.mxu0 0
  %3006 = vmatmul.mubr.bf16.gmra.mrb[0].mxu0 %v2044
  %v3007 = vpop.f32.mrb[0].mxu0
  %v3008 = vadd.f32 %v2911, %v3007
  %v3009 = vpop.f32.mrb[0].mxu0
  %v3010 = vpop.f32.mrb[0].mxu0
  %v3011 = vadd.f32 %v2914, %v3010
  %v3012 = vpop.f32.mrb[0].mxu0
  %3013 = vmatprep.mubr.bf16.mxu0 0
  %3014 = vmatmul.mubr.bf16.gmra.mrb[0].mxu0 %v2050
  %v3015 = vpop.f32.mrb[0].mxu0
  %v3016 = vadd.f32 %v2919, %v3015
  %v3017 = vpop.f32.mrb[0].mxu0
  %v3018 = vpop.f32.mrb[0].mxu0
  %v3019 = vadd.f32 %v2922, %v3018
  %v3020 = vpop.f32.mrb[0].mxu0
  %3021 = vdwg.mxu0
  %3022 = vst [vmem:[%s6] sm:$0xff] %v2960
  %3023 = vst [vmem:[%s6 + $0x8] sm:$0xff] %v2963
  %3024 = vst [vmem:[%s6 + $0x10] sm:$0xff] %v2968
  %3025 = vst [vmem:[%s6 + $0x18] sm:$0xff] %v2971
  %3026 = vst [vmem:[%s6 + $0x20] sm:$0xff] %v2976
  %3027 = vst [vmem:[%s6 + $0x28] sm:$0xff] %v2979
  %3028 = vst [vmem:[%s6 + $0x30] sm:$0xff] %v2984
  %3029 = vst [vmem:[%s6 + $0x38] sm:$0xff] %v2987
  %3030 = vst [vmem:[%s6 + $0x40] sm:$0xff] %v2992
  %3031 = vst [vmem:[%s6 + $0x48] sm:$0xff] %v2995
  %3032 = vst [vmem:[%s6 + $0x50] sm:$0xff] %v3000
  %3033 = vst [vmem:[%s6 + $0x58] sm:$0xff] %v3003
  %3034 = vst [vmem:[%s6 + $0x60] sm:$0xff] %v3008
  %3035 = vst [vmem:[%s6 + $0x68] sm:$0xff] %v3011
  %3036 = vst [vmem:[%s6 + $0x70] sm:$0xff] %v3016
  %3037 = vst [vmem:[%s6 + $0x78] sm:$0xff] %v3019
  // Predicated region
  $region26: #{reduction_forward.1} parent=0 // pred_check
    _
  $region27: #{reduction_forward.1} parent=0 // pred_check_branch
    %3039 = sbr.rel (0) target = $region29
  $region28: #{reduction_forward.1} parent=0 // pred_region
    _
  $region29: #{reduction_forward.1} parent=0 // pred_fallthru
    _
  // Predicated region
  $region30: #{reduction_forward.1} parent=0 // pred_check
    _
  $region31: #{reduction_forward.1} parent=0 // pred_check_branch
    %3041 = sbr.rel (0) target = $region33
  $region32: #{reduction_forward.1} parent=0 // pred_region
    _
  $region33: #{reduction_forward.1} parent=0 // pred_fallthru
    _

</llo_original>
